<compile_context>
chip_gen: v7x
topology: tpu7x:2x2x1
jax: 0.10.0
libtpu: 0.0.40
codegen_flags: <defaults>
</compile_context>

<pallas_src>
import jax
import jax.numpy as jnp
from jax.experimental import pallas as pl
from jax.experimental.pallas import tpu as pltpu

PAD = 128                 # lane-padded hidden width
D = 32                    # input/output feature dim
LAYERS = [100, 40, 10]
ENC = LAYERS[-1]          # bottleneck width (10)
TM_MAX = 256              # max batch-tile rows per grid step


def _ae_kernel(x_ref,
               we1_ref, be1_ref, we2_ref, be2_ref, we3_ref, be3_ref,
               wd1_ref, bd1_ref, wd2_ref, bd2_ref, wd3_ref, bd3_ref,
               dec_ref, enc_ref):
    """One batch tile of the full autoencoder forward (weights VMEM-resident)."""
    h = x_ref[...]  # (tm, D) f32

    # ---- encoder: Linear + ReLU, three times ----
    for w_ref, b_ref in ((we1_ref, be1_ref), (we2_ref, be2_ref), (we3_ref, be3_ref)):
        h = jnp.dot(h.astype(jnp.bfloat16), w_ref[...],
                    preferred_element_type=jnp.float32) + b_ref[...]
        h = jnp.maximum(h, 0.0)

    # encoded = first ENC lanes (padded lanes are exactly 0)
    enc_ref[...] = h[:, :ENC]

    # ---- decoder: Linear(+ReLU), Linear(+ReLU), Linear (no act) ----
    dec_layers = ((wd1_ref, bd1_ref), (wd2_ref, bd2_ref), (wd3_ref, bd3_ref))
    for i, (w_ref, b_ref) in enumerate(dec_layers):
        h = jnp.dot(h.astype(jnp.bfloat16), w_ref[...],
                    preferred_element_type=jnp.float32) + b_ref[...]
        if i < len(dec_layers) - 1:
            h = jnp.maximum(h, 0.0)

    dec_ref[...] = h  # (tm, D) f32, no activation on final layer


def _pad_w(w, rows, cols):
    """(in, out) f32 -> (rows, cols) zero-padded bf16."""
    out = jnp.zeros((rows, cols), jnp.float32).at[: w.shape[0], : w.shape[1]].set(w)
    return out.astype(jnp.bfloat16)


def _pad_b(b, cols):
    """(out,) f32 -> (1, cols) zero-padded f32."""
    return jnp.zeros((1, cols), jnp.float32).at[0, : b.shape[0]].set(b)


def _round_up(n, m):
    return ((n + m - 1) // m) * m


_ARG_ORDER = ("we1", "be1", "we2", "be2", "we3", "be3",
              "wd1", "bd1", "wd2", "bd2", "wd3", "bd3")


def autoencoder_forward(x, params):
    """x: (B, D) float32. params: dict of padded weights/biases.

    Returns (decoded (B, D) f32, encoded (B, ENC) f32)."""
    B = x.shape[0]
    tm = min(TM_MAX, _round_up(B, 8))        # batch tile (sublane aligned)
    Bp = _round_up(B, tm)                    # padded batch (multiple of tm)
    if Bp != B:
        x = jnp.pad(x, ((0, Bp - B), (0, 0)))
    grid = (Bp // tm,)

    tile_map = lambda i: (i, 0)              # batch-tiled arrays
    fixed_map = lambda i: (0, 0)             # VMEM-resident weights/biases

    weights = [params[k] for k in _ARG_ORDER]

    in_specs = [pl.BlockSpec((tm, D), tile_map)]
    in_specs += [pl.BlockSpec(w.shape, fixed_map) for w in weights]
    out_specs = (pl.BlockSpec((tm, D), tile_map),
                 pl.BlockSpec((tm, ENC), tile_map))

    dec, enc = pl.pallas_call(
        _ae_kernel,
        grid=grid,
        in_specs=in_specs,
        out_specs=out_specs,
        out_shape=(
            jax.ShapeDtypeStruct((Bp, D), jnp.float32),    # decoded
            jax.ShapeDtypeStruct((Bp, ENC), jnp.float32),  # encoded
        ),
        compiler_params=pltpu.CompilerParams(
            dimension_semantics=("parallel",),             # megacore on v7x
        ),
    )(x, *weights)

    if Bp != B:
        dec, enc = dec[:B], enc[:B]
    return dec, enc


def init_params(key):
    """Deterministic synthetic params (PyTorch-Linear-style init, stored (in, out)).

    Returns (padded-for-kernel params, raw f32 params for the reference)."""
    enc_dims = [(D, LAYERS[0]), (LAYERS[0], LAYERS[1]), (LAYERS[1], LAYERS[2])]
    dec_dims = [(LAYERS[2], LAYERS[1]), (LAYERS[1], LAYERS[0]), (LAYERS[0], D)]
    names = ["e1", "e2", "e3", "d1", "d2", "d3"]

    raw = {}
    keys = jax.random.split(key, 2 * len(names))
    for i, ((fan_in, fan_out), n) in enumerate(zip(enc_dims + dec_dims, names)):
        bound = 1.0 / (fan_in ** 0.5)
        raw["w" + n] = jax.random.uniform(keys[2 * i], (fan_in, fan_out),
                                          jnp.float32, -bound, bound)
        raw["b" + n] = jax.random.uniform(keys[2 * i + 1], (fan_out,),
                                          jnp.float32, -bound, bound)

    padded = {
        # encoder
        "we1": _pad_w(raw["we1"], D, PAD),   "be1": _pad_b(raw["be1"], PAD),
        "we2": _pad_w(raw["we2"], PAD, PAD), "be2": _pad_b(raw["be2"], PAD),
        "we3": _pad_w(raw["we3"], PAD, PAD), "be3": _pad_b(raw["be3"], PAD),
        # decoder
        "wd1": _pad_w(raw["wd1"], PAD, PAD), "bd1": _pad_b(raw["bd1"], PAD),
        "wd2": _pad_w(raw["wd2"], PAD, PAD), "bd2": _pad_b(raw["bd2"], PAD),
        "wd3": _pad_w(raw["wd3"], PAD, D),   "bd3": _pad_b(raw["bd3"], D),
    }
    return padded, raw


def reference_forward(x, raw):
    """Pure-JAX f32 reference matching the PyTorch module semantics."""
    h = x
    for n in ("e1", "e2", "e3"):
        h = jnp.maximum(h @ raw["w" + n] + raw["b" + n], 0.0)
    enc = h
    for i, n in enumerate(("d1", "d2", "d3")):
        h = h @ raw["w" + n] + raw["b" + n]
        if i < 2:
            h = jnp.maximum(h, 0.0)
    return h, enc


if __name__ == "__main__":
    key = jax.random.PRNGKey(0)
    kx, kp = jax.random.split(key)

    BATCH = 512  # 2 grid steps of tm=256 -> pipelined + both v7x cores active
    x = jax.random.normal(kx, (BATCH, D), jnp.float32)
    params, raw = init_params(kp)

    fwd = jax.jit(autoencoder_forward)
    decoded, encoded = fwd(x, params)
    jax.block_until_ready((decoded, encoded))

    assert decoded.shape == (BATCH, D)
    assert encoded.shape == (BATCH, ENC)

    # loose tolerance: kernel uses bf16 weights/activations with f32 accumulation
    dec_ref, enc_ref = reference_forward(x, raw)
    assert jnp.allclose(decoded, dec_ref, rtol=5e-2, atol=5e-2)
    assert jnp.allclose(encoded, enc_ref, rtol=5e-2, atol=5e-2)

    print("KERNEL_OK")
</pallas_src>

<mosaic_0001>
module attributes {stable_mosaic.version = 11 : i64} {
  func.func @_ae_kernel(%arg0: i32, %arg1: memref<256x32xf32, #tpu.memory_space<vmem>>, %arg2: memref<32x128xbf16, #tpu.memory_space<vmem>>, %arg3: memref<1x128xf32, #tpu.memory_space<vmem>>, %arg4: memref<128x128xbf16, #tpu.memory_space<vmem>>, %arg5: memref<1x128xf32, #tpu.memory_space<vmem>>, %arg6: memref<128x128xbf16, #tpu.memory_space<vmem>>, %arg7: memref<1x128xf32, #tpu.memory_space<vmem>>, %arg8: memref<128x128xbf16, #tpu.memory_space<vmem>>, %arg9: memref<1x128xf32, #tpu.memory_space<vmem>>, %arg10: memref<128x128xbf16, #tpu.memory_space<vmem>>, %arg11: memref<1x128xf32, #tpu.memory_space<vmem>>, %arg12: memref<128x32xbf16, #tpu.memory_space<vmem>>, %arg13: memref<1x32xf32, #tpu.memory_space<vmem>>, %arg14: memref<256x32xf32, #tpu.memory_space<vmem>>, %arg15: memref<256x10xf32, #tpu.memory_space<vmem>>) attributes {dimension_semantics = [#tpu.dimension_semantics<parallel>], iteration_bounds = array<i64: 2>, scalar_prefetch = 0 : i64, scratch_operands = 0 : i64, tpu.core_type = #tpu.core_type<tc>, window_params = [{transform_indices = @transform_0, window_bounds = array<i64: 256, 32>}, {pipeline_mode = #tpu.pipeline_mode<synchronous>, transform_indices = @transform_1, window_bounds = array<i64: 32, 128>}, {pipeline_mode = #tpu.pipeline_mode<synchronous>, transform_indices = @transform_2, window_bounds = array<i64: 1, 128>}, {pipeline_mode = #tpu.pipeline_mode<synchronous>, transform_indices = @transform_3, window_bounds = array<i64: 128, 128>}, {pipeline_mode = #tpu.pipeline_mode<synchronous>, transform_indices = @transform_4, window_bounds = array<i64: 1, 128>}, {pipeline_mode = #tpu.pipeline_mode<synchronous>, transform_indices = @transform_5, window_bounds = array<i64: 128, 128>}, {pipeline_mode = #tpu.pipeline_mode<synchronous>, transform_indices = @transform_6, window_bounds = array<i64: 1, 128>}, {pipeline_mode = #tpu.pipeline_mode<synchronous>, transform_indices = @transform_7, window_bounds = array<i64: 128, 128>}, {pipeline_mode = #tpu.pipeline_mode<synchronous>, transform_indices = @transform_8, window_bounds = array<i64: 1, 128>}, {pipeline_mode = #tpu.pipeline_mode<synchronous>, transform_indices = @transform_9, window_bounds = array<i64: 128, 128>}, {pipeline_mode = #tpu.pipeline_mode<synchronous>, transform_indices = @transform_10, window_bounds = array<i64: 1, 128>}, {pipeline_mode = #tpu.pipeline_mode<synchronous>, transform_indices = @transform_11, window_bounds = array<i64: 128, 32>}, {pipeline_mode = #tpu.pipeline_mode<synchronous>, transform_indices = @transform_12, window_bounds = array<i64: 1, 32>}, {transform_indices = @transform_13, window_bounds = array<i64: 256, 32>}, {transform_indices = @transform_14, window_bounds = array<i64: 256, 10>}]} {
    %c0 = arith.constant 0 : index
    %c0_0 = arith.constant 0 : index
    %0 = vector.load %arg1[%c0, %c0_0] : memref<256x32xf32, #tpu.memory_space<vmem>>, vector<256x32xf32>
    %1 = arith.truncf %0 : vector<256x32xf32> to vector<256x32xbf16>
    %c0_1 = arith.constant 0 : index
    %c0_2 = arith.constant 0 : index
    %2 = vector.load %arg2[%c0_1, %c0_2] : memref<32x128xbf16, #tpu.memory_space<vmem>>, vector<32x128xbf16>
    %cst = arith.constant dense<0.000000e+00> : vector<256x128xf32>
    %3 = tpu.matmul %1, %2, %cst {dimension_numbers = #tpu.dot_dimension_numbers<[1], [0], [0], [1], [0, 0, 1, 1], [], []>} : vector<256x32xbf16>, vector<32x128xbf16>, vector<256x128xf32> -> vector<256x128xf32>
    %c0_3 = arith.constant 0 : index
    %c0_4 = arith.constant 0 : index
    %4 = vector.load %arg3[%c0_3, %c0_4] : memref<1x128xf32, #tpu.memory_space<vmem>>, vector<1x128xf32>
    %5 = vector.broadcast %4 : vector<1x128xf32> to vector<256x128xf32>
    %6 = arith.addf %3, %5 : vector<256x128xf32>
    %cst_5 = arith.constant 0.000000e+00 : f32
    %7 = vector.broadcast %cst_5 : f32 to vector<256x128xf32>
    %8 = arith.maximumf %6, %7 : vector<256x128xf32>
    %9 = arith.truncf %8 : vector<256x128xf32> to vector<256x128xbf16>
    %c0_6 = arith.constant 0 : index
    %c0_7 = arith.constant 0 : index
    %10 = vector.load %arg4[%c0_6, %c0_7] : memref<128x128xbf16, #tpu.memory_space<vmem>>, vector<128x128xbf16>
    %cst_8 = arith.constant dense<0.000000e+00> : vector<256x128xf32>
    %11 = tpu.matmul %9, %10, %cst_8 {dimension_numbers = #tpu.dot_dimension_numbers<[1], [0], [0], [1], [0, 0, 1, 1], [], []>} : vector<256x128xbf16>, vector<128x128xbf16>, vector<256x128xf32> -> vector<256x128xf32>
    %c0_9 = arith.constant 0 : index
    %c0_10 = arith.constant 0 : index
    %12 = vector.load %arg5[%c0_9, %c0_10] : memref<1x128xf32, #tpu.memory_space<vmem>>, vector<1x128xf32>
    %13 = vector.broadcast %12 : vector<1x128xf32> to vector<256x128xf32>
    %14 = arith.addf %11, %13 : vector<256x128xf32>
    %cst_11 = arith.constant 0.000000e+00 : f32
    %15 = vector.broadcast %cst_11 : f32 to vector<256x128xf32>
    %16 = arith.maximumf %14, %15 : vector<256x128xf32>
    %17 = arith.truncf %16 : vector<256x128xf32> to vector<256x128xbf16>
    %c0_12 = arith.constant 0 : index
    %c0_13 = arith.constant 0 : index
    %18 = vector.load %arg6[%c0_12, %c0_13] : memref<128x128xbf16, #tpu.memory_space<vmem>>, vector<128x128xbf16>
    %cst_14 = arith.constant dense<0.000000e+00> : vector<256x128xf32>
    %19 = tpu.matmul %17, %18, %cst_14 {dimension_numbers = #tpu.dot_dimension_numbers<[1], [0], [0], [1], [0, 0, 1, 1], [], []>} : vector<256x128xbf16>, vector<128x128xbf16>, vector<256x128xf32> -> vector<256x128xf32>
    %c0_15 = arith.constant 0 : index
    %c0_16 = arith.constant 0 : index
    %20 = vector.load %arg7[%c0_15, %c0_16] : memref<1x128xf32, #tpu.memory_space<vmem>>, vector<1x128xf32>
    %21 = vector.broadcast %20 : vector<1x128xf32> to vector<256x128xf32>
    %22 = arith.addf %19, %21 : vector<256x128xf32>
    %cst_17 = arith.constant 0.000000e+00 : f32
    %23 = vector.broadcast %cst_17 : f32 to vector<256x128xf32>
    %24 = arith.maximumf %22, %23 : vector<256x128xf32>
    %25 = vector.extract_strided_slice %24 {offsets = [0, 0], sizes = [256, 10], strides = [1, 1]} : vector<256x128xf32> to vector<256x10xf32>
    %c0_18 = arith.constant 0 : index
    %c0_19 = arith.constant 0 : index
    %26 = vector.load %arg15[%c0_18, %c0_19] : memref<256x10xf32, #tpu.memory_space<vmem>>, vector<256x10xf32>
    tpu.vector_store %arg15[%c0_18, %c0_19], %25 {strides = array<i32>} : memref<256x10xf32, #tpu.memory_space<vmem>>, vector<256x10xf32>,
    %27 = arith.truncf %24 : vector<256x128xf32> to vector<256x128xbf16>
    %c0_20 = arith.constant 0 : index
    %c0_21 = arith.constant 0 : index
    %28 = vector.load %arg8[%c0_20, %c0_21] : memref<128x128xbf16, #tpu.memory_space<vmem>>, vector<128x128xbf16>
    %cst_22 = arith.constant dense<0.000000e+00> : vector<256x128xf32>
    %29 = tpu.matmul %27, %28, %cst_22 {dimension_numbers = #tpu.dot_dimension_numbers<[1], [0], [0], [1], [0, 0, 1, 1], [], []>} : vector<256x128xbf16>, vector<128x128xbf16>, vector<256x128xf32> -> vector<256x128xf32>
    %c0_23 = arith.constant 0 : index
    %c0_24 = arith.constant 0 : index
    %30 = vector.load %arg9[%c0_23, %c0_24] : memref<1x128xf32, #tpu.memory_space<vmem>>, vector<1x128xf32>
    %31 = vector.broadcast %30 : vector<1x128xf32> to vector<256x128xf32>
    %32 = arith.addf %29, %31 : vector<256x128xf32>
    %cst_25 = arith.constant 0.000000e+00 : f32
    %33 = vector.broadcast %cst_25 : f32 to vector<256x128xf32>
    %34 = arith.maximumf %32, %33 : vector<256x128xf32>
    %35 = arith.truncf %34 : vector<256x128xf32> to vector<256x128xbf16>
    %c0_26 = arith.constant 0 : index
    %c0_27 = arith.constant 0 : index
    %36 = vector.load %arg10[%c0_26, %c0_27] : memref<128x128xbf16, #tpu.memory_space<vmem>>, vector<128x128xbf16>
    %cst_28 = arith.constant dense<0.000000e+00> : vector<256x128xf32>
    %37 = tpu.matmul %35, %36, %cst_28 {dimension_numbers = #tpu.dot_dimension_numbers<[1], [0], [0], [1], [0, 0, 1, 1], [], []>} : vector<256x128xbf16>, vector<128x128xbf16>, vector<256x128xf32> -> vector<256x128xf32>
    %c0_29 = arith.constant 0 : index
    %c0_30 = arith.constant 0 : index
    %38 = vector.load %arg11[%c0_29, %c0_30] : memref<1x128xf32, #tpu.memory_space<vmem>>, vector<1x128xf32>
    %39 = vector.broadcast %38 : vector<1x128xf32> to vector<256x128xf32>
    %40 = arith.addf %37, %39 : vector<256x128xf32>
    %cst_31 = arith.constant 0.000000e+00 : f32
    %41 = vector.broadcast %cst_31 : f32 to vector<256x128xf32>
    %42 = arith.maximumf %40, %41 : vector<256x128xf32>
    %43 = arith.truncf %42 : vector<256x128xf32> to vector<256x128xbf16>
    %c0_32 = arith.constant 0 : index
    %c0_33 = arith.constant 0 : index
    %44 = vector.load %arg12[%c0_32, %c0_33] : memref<128x32xbf16, #tpu.memory_space<vmem>>, vector<128x32xbf16>
    %cst_34 = arith.constant dense<0.000000e+00> : vector<256x32xf32>
    %45 = tpu.matmul %43, %44, %cst_34 {dimension_numbers = #tpu.dot_dimension_numbers<[1], [0], [0], [1], [0, 0, 1, 1], [], []>} : vector<256x128xbf16>, vector<128x32xbf16>, vector<256x32xf32> -> vector<256x32xf32>
    %c0_35 = arith.constant 0 : index
    %c0_36 = arith.constant 0 : index
    %46 = vector.load %arg13[%c0_35, %c0_36] : memref<1x32xf32, #tpu.memory_space<vmem>>, vector<1x32xf32>
    %47 = vector.broadcast %46 : vector<1x32xf32> to vector<256x32xf32>
    %48 = arith.addf %45, %47 : vector<256x32xf32>
    %c0_37 = arith.constant 0 : index
    %c0_38 = arith.constant 0 : index
    %49 = vector.load %arg14[%c0_37, %c0_38] : memref<256x32xf32, #tpu.memory_space<vmem>>, vector<256x32xf32>
    tpu.vector_store %arg14[%c0_37, %c0_38], %48 {strides = array<i32>} : memref<256x32xf32, #tpu.memory_space<vmem>>, vector<256x32xf32>,
    return
  }
  func.func @transform_0(%arg0: i32) -> (i32, i32) {
    %c0_i32 = arith.constant 0 : i32
    %c0_i32_0 = arith.constant 0 : i32
    return %arg0, %c0_i32 : i32, i32
  }
  func.func @transform_1(%arg0: i32) -> (i32, i32) {
    %c0_i32 = arith.constant 0 : i32
    %c0_i32_0 = arith.constant 0 : i32
    %c0_i32_1 = arith.constant 0 : i32
    return %c0_i32, %c0_i32_0 : i32, i32
  }
  func.func @transform_2(%arg0: i32) -> (i32, i32) {
    %c0_i32 = arith.constant 0 : i32
    %c0_i32_0 = arith.constant 0 : i32
    %c0_i32_1 = arith.constant 0 : i32
    return %c0_i32, %c0_i32_0 : i32, i32
  }
  func.func @transform_3(%arg0: i32) -> (i32, i32) {
    %c0_i32 = arith.constant 0 : i32
    %c0_i32_0 = arith.constant 0 : i32
    %c0_i32_1 = arith.constant 0 : i32
    return %c0_i32, %c0_i32_0 : i32, i32
  }
  func.func @transform_4(%arg0: i32) -> (i32, i32) {
    %c0_i32 = arith.constant 0 : i32
    %c0_i32_0 = arith.constant 0 : i32
    %c0_i32_1 = arith.constant 0 : i32
    return %c0_i32, %c0_i32_0 : i32, i32
  }
  func.func @transform_5(%arg0: i32) -> (i32, i32) {
    %c0_i32 = arith.constant 0 : i32
    %c0_i32_0 = arith.constant 0 : i32
    %c0_i32_1 = arith.constant 0 : i32
    return %c0_i32, %c0_i32_0 : i32, i32
  }
  func.func @transform_6(%arg0: i32) -> (i32, i32) {
    %c0_i32 = arith.constant 0 : i32
    %c0_i32_0 = arith.constant 0 : i32
    %c0_i32_1 = arith.constant 0 : i32
    return %c0_i32, %c0_i32_0 : i32, i32
  }
  func.func @transform_7(%arg0: i32) -> (i32, i32) {
    %c0_i32 = arith.constant 0 : i32
    %c0_i32_0 = arith.constant 0 : i32
    %c0_i32_1 = arith.constant 0 : i32
    return %c0_i32, %c0_i32_0 : i32, i32
  }
  func.func @transform_8(%arg0: i32) -> (i32, i32) {
    %c0_i32 = arith.constant 0 : i32
    %c0_i32_0 = arith.constant 0 : i32
    %c0_i32_1 = arith.constant 0 : i32
    return %c0_i32, %c0_i32_0 : i32, i32
  }
  func.func @transform_9(%arg0: i32) -> (i32, i32) {
    %c0_i32 = arith.constant 0 : i32
    %c0_i32_0 = arith.constant 0 : i32
    %c0_i32_1 = arith.constant 0 : i32
    return %c0_i32, %c0_i32_0 : i32, i32
  }
  func.func @transform_10(%arg0: i32) -> (i32, i32) {
    %c0_i32 = arith.constant 0 : i32
    %c0_i32_0 = arith.constant 0 : i32
    %c0_i32_1 = arith.constant 0 : i32
    return %c0_i32, %c0_i32_0 : i32, i32
  }
  func.func @transform_11(%arg0: i32) -> (i32, i32) {
    %c0_i32 = arith.constant 0 : i32
    %c0_i32_0 = arith.constant 0 : i32
    %c0_i32_1 = arith.constant 0 : i32
    return %c0_i32, %c0_i32_0 : i32, i32
  }
  func.func @transform_12(%arg0: i32) -> (i32, i32) {
    %c0_i32 = arith.constant 0 : i32
    %c0_i32_0 = arith.constant 0 : i32
    %c0_i32_1 = arith.constant 0 : i32
    return %c0_i32, %c0_i32_0 : i32, i32
  }
  func.func @transform_13(%arg0: i32) -> (i32, i32) {
    %c0_i32 = arith.constant 0 : i32
    %c0_i32_0 = arith.constant 0 : i32
    return %arg0, %c0_i32 : i32, i32
  }
  func.func @transform_14(%arg0: i32) -> (i32, i32) {
    %c0_i32 = arith.constant 0 : i32
    %c0_i32_0 = arith.constant 0 : i32
    return %arg0, %c0_i32 : i32, i32
  }
}

</mosaic_0001>

<llo_original>
// kernel: autoencoder_forward.1
$region0: #{autoencoder_forward.1}
  #allocation0 [shape = 'u32[]', space=smem, size = 0x4, offset = 0x4, fixed_abs, tag = 'smem constant byte address 0x4 - core index']
  #allocation1 [shape = 'u32[144,128]{1,0:T(1,128)}', space=vmem, size = 0x12000, scoped, tag = 'internal scratch']
  %s0 = inlined_call_operand.vmem [shape: f32[512,32], index: 0, kind: input, shape index: {}]
  %s1 = inlined_call_operand.vmem [shape: bf16[32,128], index: 1, kind: input, shape index: {}]
  %s2 = inlined_call_operand.vmem [shape: f32[1,128], index: 2, kind: input, shape index: {}]
  %s3 = inlined_call_operand.vmem [shape: bf16[128,128], index: 3, kind: input, shape index: {}]
  %s4 = inlined_call_operand.vmem [shape: f32[1,128], index: 4, kind: input, shape index: {}]
  %s5 = inlined_call_operand.vmem [shape: bf16[128,128], index: 5, kind: input, shape index: {}]
  %s6 = inlined_call_operand.vmem [shape: f32[1,128], index: 6, kind: input, shape index: {}]
  %s7 = inlined_call_operand.vmem [shape: bf16[128,128], index: 7, kind: input, shape index: {}]
  %s8 = inlined_call_operand.vmem [shape: f32[1,128], index: 8, kind: input, shape index: {}]
  %s9 = inlined_call_operand.vmem [shape: bf16[128,128], index: 9, kind: input, shape index: {}]
  %s10 = inlined_call_operand.vmem [shape: f32[1,128], index: 10, kind: input, shape index: {}]
  %s11 = inlined_call_operand.vmem [shape: bf16[128,32], index: 11, kind: input, shape index: {}]
  %s12 = inlined_call_operand.vmem [shape: f32[1,32], index: 12, kind: input, shape index: {}]
  %s13 = inlined_call_operand.vmem [shape: f32[512,32], index: 13, kind: output, shape index: {0}]
  %s14 = inlined_call_operand.vmem [shape: f32[512,10], index: 14, kind: output, shape index: {1}]
  %15 = xla_tuple %s13, %s14
  %s16 = sld [smem:[#allocation0]]
  $region93: #{autoencoder_forward.1} parent=0
    _
  %s18 = ssub.s32 1, %s16
  %s19 = scalar_select 0, %s18, %s16
  loop: start=0, step=1, limit=4
  $region2: #{autoencoder_forward.1} parent=0 // loop_pre_header
    _
  $region3: #{autoencoder_forward.1} parent=0 // loop_header
    %s21 = sphi 0, %s25
    %p22 = scmp.ge.s32.totalorder %s21, 4
    %s31 = sphi 0, %s33
    %s34 = sphi 0, %s31
    %s35 = sphi 0, %s34
    %s51 = sphi 0, %s35
    %s55 = sphi 0, %s55
    %s57 = sphi 0, %s55
    %s58 = sphi 0, %s57
    %s72 = sphi 0, %s58
    %s76 = sphi 0, %s76
    %s78 = sphi 0, %s76
    %s79 = sphi 0, %s78
    %s93 = sphi 0, %s79
    %s97 = sphi 0, %s97
    %s99 = sphi 0, %s97
    %s100 = sphi 0, %s99
    %s114 = sphi 0, %s100
    %s118 = sphi 0, %s118
    %s120 = sphi 0, %s118
    %s121 = sphi 0, %s120
    %s135 = sphi 0, %s121
    %s139 = sphi 0, %s139
    %s141 = sphi 0, %s139
    %s142 = sphi 0, %s141
    %s156 = sphi 0, %s142
    %s160 = sphi 0, %s160
    %s162 = sphi 0, %s160
    %s163 = sphi 0, %s162
    %s177 = sphi 0, %s163
    %s181 = sphi 0, %s181
    %s183 = sphi 0, %s181
    %s184 = sphi 0, %s183
    %s198 = sphi 0, %s184
    %s202 = sphi 0, %s202
    %s204 = sphi 0, %s202
    %s205 = sphi 0, %s204
    %s219 = sphi 0, %s205
    %s223 = sphi 0, %s223
    %s225 = sphi 0, %s223
    %s226 = sphi 0, %s225
    %s240 = sphi 0, %s226
    %s244 = sphi 0, %s244
    %s246 = sphi 0, %s244
    %s247 = sphi 0, %s246
    %s261 = sphi 0, %s247
    %s265 = sphi 0, %s265
    %s267 = sphi 0, %s265
    %s268 = sphi 0, %s267
    %s282 = sphi 0, %s268
    %s286 = sphi 0, %s286
    %s288 = sphi 0, %s286
    %s289 = sphi 0, %s288
    %s303 = sphi 0, %s289
    %s309 = sphi 0, %s311
    %s312 = sphi 0, %s309
    %s313 = sphi 0, %s312
    %s329 = sphi 0, %s313
    %s335 = sphi 0, %s337
    %s338 = sphi 0, %s335
    %s339 = sphi 0, %s338
    %s355 = sphi 0, %s339
  $region4: #{autoencoder_forward.1} parent=0 // loop_header_branch
    %24 = sbr.rel (%p22) target = $region8
  $region5: #{autoencoder_forward.1} parent=0 // loop_body
    %s26 = ssub.s32 %s21, 1
    %s27 = ssub.s32 %s21, 2
    %s28 = sadd.s32 %s21, 1
    %s29 = ssub.s32 %s21, %s28
    %p30 = scmp.eq.s32.totalorder %s29, 0
    %s32 = sadd.s32 %s31, 1
    %s33 = scalar_select %p30, %s31, %s32
    %p36 = pneg %p30
    %p37 = scmp.eq.s32.totalorder %s21, 1
    %p38 = por %p36, %p37
    %p39 = scmp.ne.s32.totalorder %s31, %s34
    %p40 = scmp.eq.s32.totalorder %s21, 0
    %p41 = por %p39, %p40
    %p42 = scmp.ne.s32.totalorder %s31, %s34
    %p43 = scmp.eq.s32.totalorder %s26, 1
    %p44 = por %p42, %p43
    %p45 = scmp.ne.s32.totalorder %s34, %s35
    %p46 = scmp.eq.s32.totalorder %s26, 0
    %p47 = por %p45, %p46
    %p48 = scmp.ne.s32.totalorder %s34, %s35
    %p49 = scmp.eq.s32.totalorder %s27, 1
    %p50 = por %p48, %p49
    %p52 = scmp.ne.s32.totalorder %s35, %s51
    %p53 = scmp.eq.s32.totalorder %s27, 0
    %p54 = por %p52, %p53
    %s56 = sadd.s32 %s55, 1
    %p59 = scmp.eq.s32.totalorder %s21, 1
    %p60 = scmp.ne.s32.totalorder %s55, %s57
    %p61 = scmp.eq.s32.totalorder %s21, 0
    %p62 = por %p60, %p61
    %p63 = scmp.ne.s32.totalorder %s55, %s57
    %p64 = scmp.eq.s32.totalorder %s26, 1
    %p65 = por %p63, %p64
    %p66 = scmp.ne.s32.totalorder %s57, %s58
    %p67 = scmp.eq.s32.totalorder %s26, 0
    %p68 = por %p66, %p67
    %p69 = scmp.ne.s32.totalorder %s57, %s58
    %p70 = scmp.eq.s32.totalorder %s27, 1
    %p71 = por %p69, %p70
    %p73 = scmp.ne.s32.totalorder %s58, %s72
    %p74 = scmp.eq.s32.totalorder %s27, 0
    %p75 = por %p73, %p74
    %s77 = sadd.s32 %s76, 1
    %p80 = scmp.eq.s32.totalorder %s21, 1
    %p81 = scmp.ne.s32.totalorder %s76, %s78
    %p82 = scmp.eq.s32.totalorder %s21, 0
    %p83 = por %p81, %p82
    %p84 = scmp.ne.s32.totalorder %s76, %s78
    %p85 = scmp.eq.s32.totalorder %s26, 1
    %p86 = por %p84, %p85
    %p87 = scmp.ne.s32.totalorder %s78, %s79
    %p88 = scmp.eq.s32.totalorder %s26, 0
    %p89 = por %p87, %p88
    %p90 = scmp.ne.s32.totalorder %s78, %s79
    %p91 = scmp.eq.s32.totalorder %s27, 1
    %p92 = por %p90, %p91
    %p94 = scmp.ne.s32.totalorder %s79, %s93
    %p95 = scmp.eq.s32.totalorder %s27, 0
    %p96 = por %p94, %p95
    %s98 = sadd.s32 %s97, 1
    %p101 = scmp.eq.s32.totalorder %s21, 1
    %p102 = scmp.ne.s32.totalorder %s97, %s99
    %p103 = scmp.eq.s32.totalorder %s21, 0
    %p104 = por %p102, %p103
    %p105 = scmp.ne.s32.totalorder %s97, %s99
    %p106 = scmp.eq.s32.totalorder %s26, 1
    %p107 = por %p105, %p106
    %p108 = scmp.ne.s32.totalorder %s99, %s100
    %p109 = scmp.eq.s32.totalorder %s26, 0
    %p110 = por %p108, %p109
    %p111 = scmp.ne.s32.totalorder %s99, %s100
    %p112 = scmp.eq.s32.totalorder %s27, 1
    %p113 = por %p111, %p112
    %p115 = scmp.ne.s32.totalorder %s100, %s114
    %p116 = scmp.eq.s32.totalorder %s27, 0
    %p117 = por %p115, %p116
    %s119 = sadd.s32 %s118, 1
    %p122 = scmp.eq.s32.totalorder %s21, 1
    %p123 = scmp.ne.s32.totalorder %s118, %s120
    %p124 = scmp.eq.s32.totalorder %s21, 0
    %p125 = por %p123, %p124
    %p126 = scmp.ne.s32.totalorder %s118, %s120
    %p127 = scmp.eq.s32.totalorder %s26, 1
    %p128 = por %p126, %p127
    %p129 = scmp.ne.s32.totalorder %s120, %s121
    %p130 = scmp.eq.s32.totalorder %s26, 0
    %p131 = por %p129, %p130
    %p132 = scmp.ne.s32.totalorder %s120, %s121
    %p133 = scmp.eq.s32.totalorder %s27, 1
    %p134 = por %p132, %p133
    %p136 = scmp.ne.s32.totalorder %s121, %s135
    %p137 = scmp.eq.s32.totalorder %s27, 0
    %p138 = por %p136, %p137
    %s140 = sadd.s32 %s139, 1
    %p143 = scmp.eq.s32.totalorder %s21, 1
    %p144 = scmp.ne.s32.totalorder %s139, %s141
    %p145 = scmp.eq.s32.totalorder %s21, 0
    %p146 = por %p144, %p145
    %p147 = scmp.ne.s32.totalorder %s139, %s141
    %p148 = scmp.eq.s32.totalorder %s26, 1
    %p149 = por %p147, %p148
    %p150 = scmp.ne.s32.totalorder %s141, %s142
    %p151 = scmp.eq.s32.totalorder %s26, 0
    %p152 = por %p150, %p151
    %p153 = scmp.ne.s32.totalorder %s141, %s142
    %p154 = scmp.eq.s32.totalorder %s27, 1
    %p155 = por %p153, %p154
    %p157 = scmp.ne.s32.totalorder %s142, %s156
    %p158 = scmp.eq.s32.totalorder %s27, 0
    %p159 = por %p157, %p158
    %s161 = sadd.s32 %s160, 1
    %p164 = scmp.eq.s32.totalorder %s21, 1
    %p165 = scmp.ne.s32.totalorder %s160, %s162
    %p166 = scmp.eq.s32.totalorder %s21, 0
    %p167 = por %p165, %p166
    %p168 = scmp.ne.s32.totalorder %s160, %s162
    %p169 = scmp.eq.s32.totalorder %s26, 1
    %p170 = por %p168, %p169
    %p171 = scmp.ne.s32.totalorder %s162, %s163
    %p172 = scmp.eq.s32.totalorder %s26, 0
    %p173 = por %p171, %p172
    %p174 = scmp.ne.s32.totalorder %s162, %s163
    %p175 = scmp.eq.s32.totalorder %s27, 1
    %p176 = por %p174, %p175
    %p178 = scmp.ne.s32.totalorder %s163, %s177
    %p179 = scmp.eq.s32.totalorder %s27, 0
    %p180 = por %p178, %p179
    %s182 = sadd.s32 %s181, 1
    %p185 = scmp.eq.s32.totalorder %s21, 1
    %p186 = scmp.ne.s32.totalorder %s181, %s183
    %p187 = scmp.eq.s32.totalorder %s21, 0
    %p188 = por %p186, %p187
    %p189 = scmp.ne.s32.totalorder %s181, %s183
    %p190 = scmp.eq.s32.totalorder %s26, 1
    %p191 = por %p189, %p190
    %p192 = scmp.ne.s32.totalorder %s183, %s184
    %p193 = scmp.eq.s32.totalorder %s26, 0
    %p194 = por %p192, %p193
    %p195 = scmp.ne.s32.totalorder %s183, %s184
    %p196 = scmp.eq.s32.totalorder %s27, 1
    %p197 = por %p195, %p196
    %p199 = scmp.ne.s32.totalorder %s184, %s198
    %p200 = scmp.eq.s32.totalorder %s27, 0
    %p201 = por %p199, %p200
    %s203 = sadd.s32 %s202, 1
    %p206 = scmp.eq.s32.totalorder %s21, 1
    %p207 = scmp.ne.s32.totalorder %s202, %s204
    %p208 = scmp.eq.s32.totalorder %s21, 0
    %p209 = por %p207, %p208
    %p210 = scmp.ne.s32.totalorder %s202, %s204
    %p211 = scmp.eq.s32.totalorder %s26, 1
    %p212 = por %p210, %p211
    %p213 = scmp.ne.s32.totalorder %s204, %s205
    %p214 = scmp.eq.s32.totalorder %s26, 0
    %p215 = por %p213, %p214
    %p216 = scmp.ne.s32.totalorder %s204, %s205
    %p217 = scmp.eq.s32.totalorder %s27, 1
    %p218 = por %p216, %p217
    %p220 = scmp.ne.s32.totalorder %s205, %s219
    %p221 = scmp.eq.s32.totalorder %s27, 0
    %p222 = por %p220, %p221
    %s224 = sadd.s32 %s223, 1
    %p227 = scmp.eq.s32.totalorder %s21, 1
    %p228 = scmp.ne.s32.totalorder %s223, %s225
    %p229 = scmp.eq.s32.totalorder %s21, 0
    %p230 = por %p228, %p229
    %p231 = scmp.ne.s32.totalorder %s223, %s225
    %p232 = scmp.eq.s32.totalorder %s26, 1
    %p233 = por %p231, %p232
    %p234 = scmp.ne.s32.totalorder %s225, %s226
    %p235 = scmp.eq.s32.totalorder %s26, 0
    %p236 = por %p234, %p235
    %p237 = scmp.ne.s32.totalorder %s225, %s226
    %p238 = scmp.eq.s32.totalorder %s27, 1
    %p239 = por %p237, %p238
    %p241 = scmp.ne.s32.totalorder %s226, %s240
    %p242 = scmp.eq.s32.totalorder %s27, 0
    %p243 = por %p241, %p242
    %s245 = sadd.s32 %s244, 1
    %p248 = scmp.eq.s32.totalorder %s21, 1
    %p249 = scmp.ne.s32.totalorder %s244, %s246
    %p250 = scmp.eq.s32.totalorder %s21, 0
    %p251 = por %p249, %p250
    %p252 = scmp.ne.s32.totalorder %s244, %s246
    %p253 = scmp.eq.s32.totalorder %s26, 1
    %p254 = por %p252, %p253
    %p255 = scmp.ne.s32.totalorder %s246, %s247
    %p256 = scmp.eq.s32.totalorder %s26, 0
    %p257 = por %p255, %p256
    %p258 = scmp.ne.s32.totalorder %s246, %s247
    %p259 = scmp.eq.s32.totalorder %s27, 1
    %p260 = por %p258, %p259
    %p262 = scmp.ne.s32.totalorder %s247, %s261
    %p263 = scmp.eq.s32.totalorder %s27, 0
    %p264 = por %p262, %p263
    %s266 = sadd.s32 %s265, 1
    %p269 = scmp.eq.s32.totalorder %s21, 1
    %p270 = scmp.ne.s32.totalorder %s265, %s267
    %p271 = scmp.eq.s32.totalorder %s21, 0
    %p272 = por %p270, %p271
    %p273 = scmp.ne.s32.totalorder %s265, %s267
    %p274 = scmp.eq.s32.totalorder %s26, 1
    %p275 = por %p273, %p274
    %p276 = scmp.ne.s32.totalorder %s267, %s268
    %p277 = scmp.eq.s32.totalorder %s26, 0
    %p278 = por %p276, %p277
    %p279 = scmp.ne.s32.totalorder %s267, %s268
    %p280 = scmp.eq.s32.totalorder %s27, 1
    %p281 = por %p279, %p280
    %p283 = scmp.ne.s32.totalorder %s268, %s282
    %p284 = scmp.eq.s32.totalorder %s27, 0
    %p285 = por %p283, %p284
    %s287 = sadd.s32 %s286, 1
    %p290 = scmp.eq.s32.totalorder %s21, 1
    %p291 = scmp.ne.s32.totalorder %s286, %s288
    %p292 = scmp.eq.s32.totalorder %s21, 0
    %p293 = por %p291, %p292
    %p294 = scmp.ne.s32.totalorder %s286, %s288
    %p295 = scmp.eq.s32.totalorder %s26, 1
    %p296 = por %p294, %p295
    %p297 = scmp.ne.s32.totalorder %s288, %s289
    %p298 = scmp.eq.s32.totalorder %s26, 0
    %p299 = por %p297, %p298
    %p300 = scmp.ne.s32.totalorder %s288, %s289
    %p301 = scmp.eq.s32.totalorder %s27, 1
    %p302 = por %p300, %p301
    %p304 = scmp.ne.s32.totalorder %s289, %s303
    %p305 = scmp.eq.s32.totalorder %s27, 0
    %p306 = por %p304, %p305
    %s307 = ssub.s32 %s21, %s28
    %p308 = scmp.eq.s32.totalorder %s307, 0
    %s310 = sadd.s32 %s309, 1
    %s311 = scalar_select %p308, %s309, %s310
    %p314 = pneg %p308
    %p315 = scmp.eq.s32.totalorder %s21, 1
    %p316 = por %p314, %p315
    %p317 = scmp.ne.s32.totalorder %s309, %s312
    %p318 = scmp.eq.s32.totalorder %s21, 0
    %p319 = por %p317, %p318
    %p320 = scmp.ne.s32.totalorder %s309, %s312
    %p321 = scmp.eq.s32.totalorder %s26, 1
    %p322 = por %p320, %p321
    %p323 = scmp.ne.s32.totalorder %s312, %s313
    %p324 = scmp.eq.s32.totalorder %s26, 0
    %p325 = por %p323, %p324
    %p326 = scmp.ne.s32.totalorder %s312, %s313
    %p327 = scmp.eq.s32.totalorder %s27, 1
    %p328 = por %p326, %p327
    %p330 = scmp.ne.s32.totalorder %s313, %s329
    %p331 = scmp.eq.s32.totalorder %s27, 0
    %p332 = por %p330, %p331
    %s333 = ssub.s32 %s21, %s28
    %p334 = scmp.eq.s32.totalorder %s333, 0
    %s336 = sadd.s32 %s335, 1
    %s337 = scalar_select %p334, %s335, %s336
    %p340 = pneg %p334
    %p341 = scmp.eq.s32.totalorder %s21, 1
    %p342 = por %p340, %p341
    %p343 = scmp.ne.s32.totalorder %s335, %s338
    %p344 = scmp.eq.s32.totalorder %s21, 0
    %p345 = por %p343, %p344
    %p346 = scmp.ne.s32.totalorder %s335, %s338
    %p347 = scmp.eq.s32.totalorder %s26, 1
    %p348 = por %p346, %p347
    %p349 = scmp.ne.s32.totalorder %s338, %s339
    %p350 = scmp.eq.s32.totalorder %s26, 0
    %p351 = por %p349, %p350
    %p352 = scmp.ne.s32.totalorder %s338, %s339
    %p353 = scmp.eq.s32.totalorder %s27, 1
    %p354 = por %p352, %p353
    %p356 = scmp.ne.s32.totalorder %s339, %s355
    %p357 = scmp.eq.s32.totalorder %s27, 0
    %p358 = por %p356, %p357
    %p359 = scmp.le.s32.totalorder 1, %s21
    %p360 = scmp.lt.s32.totalorder %s21, 3
    %p361 = pnand %p359, %p360
    %p362 = pneg %p361
    // Predicated region
    $region9: #{autoencoder_forward.1} parent=5 // pred_check
      _
    $region10: #{autoencoder_forward.1} parent=5 // pred_check_branch
      %364 = sbr.rel (%p361) target = $region12
    $region11: #{autoencoder_forward.1} parent=5 // pred_region
      %s365 = ssub.s32 %s21, 1
      // Predicated region
      $region13: #{autoencoder_forward.1} parent=11 // pred_check
        %p366 = pneg %p68
      $region14: #{autoencoder_forward.1} parent=11 // pred_check_branch
        %368 = sbr.rel (%p366) target = $region16
      $region15: #{autoencoder_forward.1} parent=11 // pred_region
        _
      $region16: #{autoencoder_forward.1} parent=11 // pred_fallthru
        _
      // Predicated region
      $region17: #{autoencoder_forward.1} parent=11 // pred_check
        %p369 = pneg %p89
      $region18: #{autoencoder_forward.1} parent=11 // pred_check_branch
        %371 = sbr.rel (%p369) target = $region20
      $region19: #{autoencoder_forward.1} parent=11 // pred_region
        _
      $region20: #{autoencoder_forward.1} parent=11 // pred_fallthru
        _
      // Predicated region
      $region21: #{autoencoder_forward.1} parent=11 // pred_check
        %p372 = pneg %p110
      $region22: #{autoencoder_forward.1} parent=11 // pred_check_branch
        %374 = sbr.rel (%p372) target = $region24
      $region23: #{autoencoder_forward.1} parent=11 // pred_region
        _
      $region24: #{autoencoder_forward.1} parent=11 // pred_fallthru
        _
      // Predicated region
      $region25: #{autoencoder_forward.1} parent=11 // pred_check
        %p375 = pneg %p131
      $region26: #{autoencoder_forward.1} parent=11 // pred_check_branch
        %377 = sbr.rel (%p375) target = $region28
      $region27: #{autoencoder_forward.1} parent=11 // pred_region
        _
      $region28: #{autoencoder_forward.1} parent=11 // pred_fallthru
        _
      // Predicated region
      $region29: #{autoencoder_forward.1} parent=11 // pred_check
        %p378 = pneg %p152
      $region30: #{autoencoder_forward.1} parent=11 // pred_check_branch
        %380 = sbr.rel (%p378) target = $region32
      $region31: #{autoencoder_forward.1} parent=11 // pred_region
        _
      $region32: #{autoencoder_forward.1} parent=11 // pred_fallthru
        _
      // Predicated region
      $region33: #{autoencoder_forward.1} parent=11 // pred_check
        %p381 = pneg %p173
      $region34: #{autoencoder_forward.1} parent=11 // pred_check_branch
        %383 = sbr.rel (%p381) target = $region36
      $region35: #{autoencoder_forward.1} parent=11 // pred_region
        _
      $region36: #{autoencoder_forward.1} parent=11 // pred_fallthru
        _
      // Predicated region
      $region37: #{autoencoder_forward.1} parent=11 // pred_check
        %p384 = pneg %p194
      $region38: #{autoencoder_forward.1} parent=11 // pred_check_branch
        %386 = sbr.rel (%p384) target = $region40
      $region39: #{autoencoder_forward.1} parent=11 // pred_region
        _
      $region40: #{autoencoder_forward.1} parent=11 // pred_fallthru
        _
      // Predicated region
      $region41: #{autoencoder_forward.1} parent=11 // pred_check
        %p387 = pneg %p215
      $region42: #{autoencoder_forward.1} parent=11 // pred_check_branch
        %389 = sbr.rel (%p387) target = $region44
      $region43: #{autoencoder_forward.1} parent=11 // pred_region
        _
      $region44: #{autoencoder_forward.1} parent=11 // pred_fallthru
        _
      // Predicated region
      $region45: #{autoencoder_forward.1} parent=11 // pred_check
        %p390 = pneg %p236
      $region46: #{autoencoder_forward.1} parent=11 // pred_check_branch
        %392 = sbr.rel (%p390) target = $region48
      $region47: #{autoencoder_forward.1} parent=11 // pred_region
        _
      $region48: #{autoencoder_forward.1} parent=11 // pred_fallthru
        _
      // Predicated region
      $region49: #{autoencoder_forward.1} parent=11 // pred_check
        %p393 = pneg %p257
      $region50: #{autoencoder_forward.1} parent=11 // pred_check_branch
        %395 = sbr.rel (%p393) target = $region52
      $region51: #{autoencoder_forward.1} parent=11 // pred_region
        _
      $region52: #{autoencoder_forward.1} parent=11 // pred_fallthru
        _
      // Predicated region
      $region53: #{autoencoder_forward.1} parent=11 // pred_check
        %p396 = pneg %p278
      $region54: #{autoencoder_forward.1} parent=11 // pred_check_branch
        %398 = sbr.rel (%p396) target = $region56
      $region55: #{autoencoder_forward.1} parent=11 // pred_region
        _
      $region56: #{autoencoder_forward.1} parent=11 // pred_fallthru
        _
      // Predicated region
      $region57: #{autoencoder_forward.1} parent=11 // pred_check
        %p399 = pneg %p299
      $region58: #{autoencoder_forward.1} parent=11 // pred_check_branch
        %401 = sbr.rel (%p399) target = $region60
      $region59: #{autoencoder_forward.1} parent=11 // pred_region
        _
      $region60: #{autoencoder_forward.1} parent=11 // pred_fallthru
        _
    $region12: #{autoencoder_forward.1} parent=5 // pred_fallthru
      _
    %p402 = scmp.lt.s32.totalorder %s21, 2
    // Predicated region
    $region61: #{autoencoder_forward.1} parent=5 // pred_check
      %p403 = pneg %p402
    $region62: #{autoencoder_forward.1} parent=5 // pred_check_branch
      %405 = sbr.rel (%p403) target = $region64
    $region63: #{autoencoder_forward.1} parent=5 // pred_region
      // Predicated region
      $region65: #{autoencoder_forward.1} parent=63 // pred_check
        %p406 = pneg %p41
      $region66: #{autoencoder_forward.1} parent=63 // pred_check_branch
        %408 = sbr.rel (%p406) target = $region68
      $region67: #{autoencoder_forward.1} parent=63 // pred_region
        %s409 = smul.u32 32, %s21
        %p410 = scmp.lt.s32.totalorder %s409, 63
        %s411 = scalar_select %p410, %s409, 63
        %s412 = smul.addr %s411, 8
        %s413 = scalar_lea.vmem %s0, %s412
        %s414 = smul.u32 32, %s21
      $region68: #{autoencoder_forward.1} parent=63 // pred_fallthru
        _
    $region64: #{autoencoder_forward.1} parent=5 // pred_fallthru
      _
    %p415 = scmp.le.s32.totalorder 1, %s21
    %p416 = scmp.lt.s32.totalorder %s21, 3
    %p417 = pnand %p415, %p416
    %p418 = pneg %p417
    // Predicated region
    $region69: #{autoencoder_forward.1} parent=5 // pred_check
      _
    $region70: #{autoencoder_forward.1} parent=5 // pred_check_branch
      %420 = sbr.rel (%p417) target = $region72
    $region71: #{autoencoder_forward.1} parent=5 // pred_region
      %s421 = ssub.s32 %s21, 1
      %s422 = smul.u32 32, %s26
      %p423 = scmp.lt.s32.totalorder %s422, 63
      %s424 = scalar_select %p423, %s422, 63
      %s425 = smul.addr %s424, 8
      %s426 = scalar_lea.vmem %s0, %s425
      %p427 = pneg %p47
      %p428 = pneg %p44
      %p429 = pneg %p68
      %p430 = pneg %p65
      %p431 = pneg %p89
      %p432 = pneg %p86
      %p433 = pneg %p110
      %p434 = pneg %p107
      %p435 = pneg %p131
      %p436 = pneg %p128
      %p437 = pneg %p152
      %p438 = pneg %p149
      %p439 = pneg %p173
      %p440 = pneg %p170
      %p441 = pneg %p194
      %p442 = pneg %p191
      %p443 = pneg %p215
      %p444 = pneg %p212
      %p445 = pneg %p236
      %p446 = pneg %p233
      %p447 = pneg %p257
      %p448 = pneg %p254
      %p449 = pneg %p278
      %p450 = pneg %p275
      %p451 = pneg %p299
      %p452 = pneg %p296
      %p453 = pneg %p325
      %p454 = pneg %p322
      %s455 = smul.u32 32, %s26
      %p456 = scmp.lt.s32.totalorder %s455, 63
      %s457 = scalar_select %p456, %s455, 63
      %s458 = smul.addr %s457, 8
      %s459 = scalar_lea.vmem %s13, %s458
      %p460 = pneg %p351
      %p461 = pneg %p348
      %s462 = smul.u32 32, %s26
      %p463 = scmp.lt.s32.totalorder %s462, 63
      %s464 = scalar_select %p463, %s462, 63
      %s465 = smul.addr %s464, 8
      %s466 = scalar_lea.vmem %s14, %s465
      %s467 = smul.u32 32, %s26
      %p468 = scmp.lt.s32.totalorder %s467, 63
      %s469 = scalar_select %p468, %s467, 63
      %s470 = smul.addr %s469, 8
      %s471 = scalar_lea.vmem %s0, %s470
      %s472 = smul.u32 32, %s26
      %s473 = smul.u32 32, %s26
      %p474 = scmp.lt.s32.totalorder %s473, 63
      %s475 = scalar_select %p474, %s473, 63
      %s476 = smul.addr %s475, 8
      %s477 = scalar_lea.vmem %s13, %s476
      %s478 = smul.u32 32, %s26
      %s479 = smul.u32 32, %s26
      %p480 = scmp.lt.s32.totalorder %s479, 63
      %s481 = scalar_select %p480, %s479, 63
      %s482 = smul.addr %s481, 8
      %s483 = scalar_lea.vmem %s14, %s482
      %s484 = smul.u32 32, %s26
      %v486 = vld [vmem:[%s471] sm:$0xff]
      %v487 = vld [vmem:[%s471 + $0x8] sm:$0xff]
      %v488 = vld [vmem:[%s471 + $0x10] sm:$0xff]
      %v489 = vld [vmem:[%s471 + $0x18] sm:$0xff]
      %v490 = vld [vmem:[%s471 + $0x20] sm:$0xff]
      %v491 = vld [vmem:[%s471 + $0x28] sm:$0xff]
      %v492 = vld [vmem:[%s471 + $0x30] sm:$0xff]
      %v493 = vld [vmem:[%s471 + $0x38] sm:$0xff]
      %v494 = vld [vmem:[%s471 + $0x40] sm:$0xff]
      %v495 = vld [vmem:[%s471 + $0x48] sm:$0xff]
      %v496 = vld [vmem:[%s471 + $0x50] sm:$0xff]
      %v497 = vld [vmem:[%s471 + $0x58] sm:$0xff]
      %v498 = vld [vmem:[%s471 + $0x60] sm:$0xff]
      %v499 = vld [vmem:[%s471 + $0x68] sm:$0xff]
      %v500 = vld [vmem:[%s471 + $0x70] sm:$0xff]
      %v501 = vld [vmem:[%s471 + $0x78] sm:$0xff]
      %v502 = vld [vmem:[%s471 + $0x80] sm:$0xff]
      %v503 = vld [vmem:[%s471 + $0x88] sm:$0xff]
      %v504 = vld [vmem:[%s471 + $0x90] sm:$0xff]
      %v505 = vld [vmem:[%s471 + $0x98] sm:$0xff]
      %v506 = vld [vmem:[%s471 + $0xa0] sm:$0xff]
      %v507 = vld [vmem:[%s471 + $0xa8] sm:$0xff]
      %v508 = vld [vmem:[%s471 + $0xb0] sm:$0xff]
      %v509 = vld [vmem:[%s471 + $0xb8] sm:$0xff]
      %v510 = vld [vmem:[%s471 + $0xc0] sm:$0xff]
      %v511 = vld [vmem:[%s471 + $0xc8] sm:$0xff]
      %v512 = vld [vmem:[%s471 + $0xd0] sm:$0xff]
      %v513 = vld [vmem:[%s471 + $0xd8] sm:$0xff]
      %v514 = vld [vmem:[%s471 + $0xe0] sm:$0xff]
      %v515 = vld [vmem:[%s471 + $0xe8] sm:$0xff]
      %v516 = vld [vmem:[%s471 + $0xf0] sm:$0xff]
      %v517 = vld [vmem:[%s471 + $0xf8] sm:$0xff]
      %v518 = vpack.c.bf16 %v487, %v486
      %v519 = vpack.c.bf16 %v489, %v488
      %v520 = vpack.c.bf16 %v491, %v490
      %v521 = vpack.c.bf16 %v493, %v492
      %v522 = vpack.c.bf16 %v495, %v494
      %v523 = vpack.c.bf16 %v497, %v496
      %v524 = vpack.c.bf16 %v499, %v498
      %v525 = vpack.c.bf16 %v501, %v500
      %v526 = vpack.c.bf16 %v503, %v502
      %v527 = vpack.c.bf16 %v505, %v504
      %v528 = vpack.c.bf16 %v507, %v506
      %v529 = vpack.c.bf16 %v509, %v508
      %v530 = vpack.c.bf16 %v511, %v510
      %v531 = vpack.c.bf16 %v513, %v512
      %v532 = vpack.c.bf16 %v515, %v514
      %v533 = vpack.c.bf16 %v517, %v516
      %v534 = vld [vmem:[%s1] sm:$0xf]
      %v535 = vld [vmem:[%s1 + $0x4] sm:$0xf]
      %v536 = vld [vmem:[%s1 + $0x8] sm:$0xf]
      %v537 = vld [vmem:[%s1 + $0xc] sm:$0xf]
      %v538 = vld [vmem:[%s2] sm:$0x1]
      %v540 = vlaneseq
      %v541 = vshrl.u32 %v540, 7
      %v542 = vsub.s32 0, %v541
      %v543 = vrot.slane %v538, %v542
      %v549 = vunpack.c.l.b16 %v534
      %v550 = vunpack.c.l.b16 %v535
      %v551 = vunpack.c.l.b16 %v536
      %v552 = vunpack.c.l.b16 %v537
      %v553 = vpack.c.b16 %v550, %v549
      %v554 = vpack.c.b16 %v552, %v551
      %vm557 = vcmask 261120
      %v559 = vsel %vm557, %v518, 0
      %v562 = vsel %vm557, %v519, 0
      %v565 = vsel %vm557, %v520, 0
      %v568 = vsel %vm557, %v521, 0
      %v571 = vsel %vm557, %v522, 0
      %v574 = vsel %vm557, %v523, 0
      %v577 = vsel %vm557, %v524, 0
      %v580 = vsel %vm557, %v525, 0
      %v583 = vsel %vm557, %v526, 0
      %v586 = vsel %vm557, %v527, 0
      %v589 = vsel %vm557, %v528, 0
      %v592 = vsel %vm557, %v529, 0
      %v595 = vsel %vm557, %v530, 0
      %v598 = vsel %vm557, %v531, 0
      %v601 = vsel %vm557, %v532, 0
      %v604 = vsel %vm557, %v533, 0
      %606 = vmatprep.subr.bf16.mxu0 0
      %607 = vmatpush1.bf16.msra.mxu0 %v553
      %608 = vmatprep.subr.bf16.mxu0 0
      %609 = vmatpush1.bf16.msra.mxu0 %v554
      %610 = vmatprep.subr.bf16.mxu0 0
      %611 = vmatpush1.bf16.msra.mxu0 0
      %612 = vmatprep.subr.bf16.mxu0 0
      %613 = vmatpush1.bf16.msra.mxu0 0
      %614 = vmatprep.subr.bf16.mxu0 0
      %615 = vmatpush1.bf16.msra.mxu0 0
      %616 = vmatprep.subr.bf16.mxu0 0
      %617 = vmatpush1.bf16.msra.mxu0 0
      %618 = vmatprep.subr.bf16.mxu0 0
      %619 = vmatpush1.bf16.msra.mxu0 0
      %620 = vmatprep.subr.bf16.mxu0 0
      %621 = vmatpush1.bf16.msra.mxu0 0
      %622 = vmatprep.subr.bf16.mxu0 0
      %623 = vmatpush1.bf16.msra.mxu0 0
      %624 = vmatprep.subr.bf16.mxu0 0
      %625 = vmatpush1.bf16.msra.mxu0 0
      %626 = vmatprep.subr.bf16.mxu0 0
      %627 = vmatpush1.bf16.msra.mxu0 0
      %628 = vmatprep.subr.bf16.mxu0 0
      %629 = vmatpush1.bf16.msra.mxu0 0
      %630 = vmatprep.subr.bf16.mxu0 0
      %631 = vmatpush1.bf16.msra.mxu0 0
      %632 = vmatprep.subr.bf16.mxu0 0
      %633 = vmatpush1.bf16.msra.mxu0 0
      %634 = vmatprep.subr.bf16.mxu0 0
      %635 = vmatpush1.bf16.msra.mxu0 0
      %636 = vmatprep.subr.bf16.mxu0 0
      %637 = vmatpush1.bf16.msra.mxu0 0
      %638 = vmatprep.mubr.bf16.mxu0 0
      %639 = vmatmul.mubr.bf16.gmra.mrb[0].mxu0 %v559
      %v640 = vpop.f32.mrb[0].mxu0
      %v641 = vadd.f32 %v543, %v640
      %v642 = vpop.f32.mrb[0].mxu0
      %v643 = vpop.f32.mrb[0].mxu0
      %v644 = vadd.f32 %v543, %v643
      %v645 = vpop.f32.mrb[0].mxu0
      %646 = vmatprep.mubr.bf16.mxu0 0
      %647 = vmatmul.mubr.bf16.gmra.mrb[0].mxu0 %v562
      %v648 = vpop.f32.mrb[0].mxu0
      %v649 = vadd.f32 %v543, %v648
      %v650 = vpop.f32.mrb[0].mxu0
      %v651 = vpop.f32.mrb[0].mxu0
      %v652 = vadd.f32 %v543, %v651
      %v653 = vpop.f32.mrb[0].mxu0
      %654 = vmatprep.mubr.bf16.mxu0 0
      %655 = vmatmul.mubr.bf16.gmra.mrb[0].mxu0 %v565
      %v656 = vpop.f32.mrb[0].mxu0
      %v657 = vadd.f32 %v543, %v656
      %v658 = vpop.f32.mrb[0].mxu0
      %v659 = vpop.f32.mrb[0].mxu0
      %v660 = vadd.f32 %v543, %v659
      %v661 = vpop.f32.mrb[0].mxu0
      %662 = vmatprep.mubr.bf16.mxu0 0
      %663 = vmatmul.mubr.bf16.gmra.mrb[0].mxu0 %v568
      %v664 = vpop.f32.mrb[0].mxu0
      %v665 = vadd.f32 %v543, %v664
      %v666 = vpop.f32.mrb[0].mxu0
      %v667 = vpop.f32.mrb[0].mxu0
      %v668 = vadd.f32 %v543, %v667
      %v669 = vpop.f32.mrb[0].mxu0
      %670 = vmatprep.mubr.bf16.mxu0 0
      %671 = vmatmul.mubr.bf16.gmra.mrb[0].mxu0 %v571
      %v672 = vpop.f32.mrb[0].mxu0
      %v673 = vadd.f32 %v543, %v672
      %v674 = vpop.f32.mrb[0].mxu0
      %v675 = vpop.f32.mrb[0].mxu0
      %v676 = vadd.f32 %v543, %v675
      %v677 = vpop.f32.mrb[0].mxu0
      %678 = vmatprep.mubr.bf16.mxu0 0
      %679 = vmatmul.mubr.bf16.gmra.mrb[0].mxu0 %v574
      %v680 = vpop.f32.mrb[0].mxu0
      %v681 = vadd.f32 %v543, %v680
      %v682 = vpop.f32.mrb[0].mxu0
      %v683 = vpop.f32.mrb[0].mxu0
      %v684 = vadd.f32 %v543, %v683
      %v685 = vpop.f32.mrb[0].mxu0
      %686 = vmatprep.mubr.bf16.mxu0 0
      %687 = vmatmul.mubr.bf16.gmra.mrb[0].mxu0 %v577
      %v688 = vpop.f32.mrb[0].mxu0
      %v689 = vadd.f32 %v543, %v688
      %v690 = vpop.f32.mrb[0].mxu0
      %v691 = vpop.f32.mrb[0].mxu0
      %v692 = vadd.f32 %v543, %v691
      %v693 = vpop.f32.mrb[0].mxu0
      %694 = vmatprep.mubr.bf16.mxu0 0
      %695 = vmatmul.mubr.bf16.gmra.mrb[0].mxu0 %v580
      %v696 = vpop.f32.mrb[0].mxu0
      %v697 = vadd.f32 %v543, %v696
      %v698 = vpop.f32.mrb[0].mxu0
      %v699 = vpop.f32.mrb[0].mxu0
      %v700 = vadd.f32 %v543, %v699
      %v701 = vpop.f32.mrb[0].mxu0
      %702 = vmatprep.mubr.bf16.mxu0 0
      %703 = vmatmul.mubr.bf16.gmra.mrb[0].mxu0 %v583
      %v704 = vpop.f32.mrb[0].mxu0
      %v705 = vadd.f32 %v543, %v704
      %v706 = vpop.f32.mrb[0].mxu0
      %v707 = vpop.f32.mrb[0].mxu0
      %v708 = vadd.f32 %v543, %v707
      %v709 = vpop.f32.mrb[0].mxu0
      %710 = vmatprep.mubr.bf16.mxu0 0
      %711 = vmatmul.mubr.bf16.gmra.mrb[0].mxu0 %v586
      %v712 = vpop.f32.mrb[0].mxu0
      %v713 = vadd.f32 %v543, %v712
      %v714 = vpop.f32.mrb[0].mxu0
      %v715 = vpop.f32.mrb[0].mxu0
      %v716 = vadd.f32 %v543, %v715
      %v717 = vpop.f32.mrb[0].mxu0
      %718 = vmatprep.mubr.bf16.mxu0 0
      %719 = vmatmul.mubr.bf16.gmra.mrb[0].mxu0 %v589
      %v720 = vpop.f32.mrb[0].mxu0
      %v721 = vadd.f32 %v543, %v720
      %v722 = vpop.f32.mrb[0].mxu0
      %v723 = vpop.f32.mrb[0].mxu0
      %v724 = vadd.f32 %v543, %v723
      %v725 = vpop.f32.mrb[0].mxu0
      %726 = vmatprep.mubr.bf16.mxu0 0
      %727 = vmatmul.mubr.bf16.gmra.mrb[0].mxu0 %v592
      %v728 = vpop.f32.mrb[0].mxu0
      %v729 = vadd.f32 %v543, %v728
      %v730 = vpop.f32.mrb[0].mxu0
      %v731 = vpop.f32.mrb[0].mxu0
      %v732 = vadd.f32 %v543, %v731
      %v733 = vpop.f32.mrb[0].mxu0
      %734 = vmatprep.mubr.bf16.mxu0 0
      %735 = vmatmul.mubr.bf16.gmra.mrb[0].mxu0 %v595
      %v736 = vpop.f32.mrb[0].mxu0
      %v737 = vadd.f32 %v543, %v736
      %v738 = vpop.f32.mrb[0].mxu0
      %v739 = vpop.f32.mrb[0].mxu0
      %v740 = vadd.f32 %v543, %v739
      %v741 = vpop.f32.mrb[0].mxu0
      %742 = vmatprep.mubr.bf16.mxu0 0
      %743 = vmatmul.mubr.bf16.gmra.mrb[0].mxu0 %v598
      %v744 = vpop.f32.mrb[0].mxu0
      %v745 = vadd.f32 %v543, %v744
      %v746 = vpop.f32.mrb[0].mxu0
      %v747 = vpop.f32.mrb[0].mxu0
      %v748 = vadd.f32 %v543, %v747
      %v749 = vpop.f32.mrb[0].mxu0
      %750 = vmatprep.mubr.bf16.mxu0 0
      %751 = vmatmul.mubr.bf16.gmra.mrb[0].mxu0 %v601
      %v752 = vpop.f32.mrb[0].mxu0
      %v753 = vadd.f32 %v543, %v752
      %v754 = vpop.f32.mrb[0].mxu0
      %v755 = vpop.f32.mrb[0].mxu0
      %v756 = vadd.f32 %v543, %v755
      %v757 = vpop.f32.mrb[0].mxu0
      %758 = vmatprep.mubr.bf16.mxu0 0
      %759 = vmatmul.mubr.bf16.gmra.mrb[0].mxu0 %v604
      %v760 = vpop.f32.mrb[0].mxu0
      %v761 = vadd.f32 %v543, %v760
      %v762 = vpop.f32.mrb[0].mxu0
      %v763 = vpop.f32.mrb[0].mxu0
      %v764 = vadd.f32 %v543, %v763
      %v765 = vpop.f32.mrb[0].mxu0
      %766 = vdwg.mxu0
      %v767 = vmax.f32 %v641, 0.0
      %v768 = vmax.f32 %v644, 0.0
      %v769 = vmax.f32 %v649, 0.0
      %v770 = vmax.f32 %v652, 0.0
      %v771 = vmax.f32 %v657, 0.0
      %v772 = vmax.f32 %v660, 0.0
      %v773 = vmax.f32 %v665, 0.0
      %v774 = vmax.f32 %v668, 0.0
      %v775 = vmax.f32 %v673, 0.0
      %v776 = vmax.f32 %v676, 0.0
      %v777 = vmax.f32 %v681, 0.0
      %v778 = vmax.f32 %v684, 0.0
      %v779 = vmax.f32 %v689, 0.0
      %v780 = vmax.f32 %v692, 0.0
      %v781 = vmax.f32 %v697, 0.0
      %v782 = vmax.f32 %v700, 0.0
      %v783 = vmax.f32 %v705, 0.0
      %v784 = vmax.f32 %v708, 0.0
      %v785 = vmax.f32 %v713, 0.0
      %v786 = vmax.f32 %v716, 0.0
      %v787 = vmax.f32 %v721, 0.0
      %v788 = vmax.f32 %v724, 0.0
      %v789 = vmax.f32 %v729, 0.0
      %v790 = vmax.f32 %v732, 0.0
      %v791 = vmax.f32 %v737, 0.0
      %v792 = vmax.f32 %v740, 0.0
      %v793 = vmax.f32 %v745, 0.0
      %v794 = vmax.f32 %v748, 0.0
      %v795 = vmax.f32 %v753, 0.0
      %v796 = vmax.f32 %v756, 0.0
      %v797 = vmax.f32 %v761, 0.0
      %v798 = vmax.f32 %v764, 0.0
      %v799 = vpack.c.bf16 %v768, %v767
      %v800 = vpack.c.bf16 %v770, %v769
      %v801 = vpack.c.bf16 %v772, %v771
      %v802 = vpack.c.bf16 %v774, %v773
      %v803 = vpack.c.bf16 %v776, %v775
      %v804 = vpack.c.bf16 %v778, %v777
      %v805 = vpack.c.bf16 %v780, %v779
      %v806 = vpack.c.bf16 %v782, %v781
      %v807 = vpack.c.bf16 %v784, %v783
      %v808 = vpack.c.bf16 %v786, %v785
      %v809 = vpack.c.bf16 %v788, %v787
      %v810 = vpack.c.bf16 %v790, %v789
      %v811 = vpack.c.bf16 %v792, %v791
      %v812 = vpack.c.bf16 %v794, %v793
      %v813 = vpack.c.bf16 %v796, %v795
      %v814 = vpack.c.bf16 %v798, %v797
      %v815 = vld [vmem:[%s3] sm:$0xf]
      %v816 = vld [vmem:[%s3 + $0x4] sm:$0xf]
      %v817 = vld [vmem:[%s3 + $0x8] sm:$0xf]
      %v818 = vld [vmem:[%s3 + $0xc] sm:$0xf]
      %v819 = vld [vmem:[%s3 + $0x10] sm:$0xf]
      %v820 = vld [vmem:[%s3 + $0x14] sm:$0xf]
      %v821 = vld [vmem:[%s3 + $0x18] sm:$0xf]
      %v822 = vld [vmem:[%s3 + $0x1c] sm:$0xf]
      %v823 = vld [vmem:[%s3 + $0x20] sm:$0xf]
      %v824 = vld [vmem:[%s3 + $0x24] sm:$0xf]
      %v825 = vld [vmem:[%s3 + $0x28] sm:$0xf]
      %v826 = vld [vmem:[%s3 + $0x2c] sm:$0xf]
      %v827 = vld [vmem:[%s3 + $0x30] sm:$0xf]
      %v828 = vld [vmem:[%s3 + $0x34] sm:$0xf]
      %v829 = vld [vmem:[%s3 + $0x38] sm:$0xf]
      %v830 = vld [vmem:[%s3 + $0x3c] sm:$0xf]
      %v831 = vld [vmem:[%s4] sm:$0x1]
      %v833 = vlaneseq
      %v834 = vshrl.u32 %v833, 7
      %v835 = vsub.s32 0, %v834
      %v836 = vrot.slane %v831, %v835
      %v854 = vunpack.c.l.b16 %v815
      %v855 = vunpack.c.l.b16 %v816
      %v856 = vunpack.c.l.b16 %v817
      %v857 = vunpack.c.l.b16 %v818
      %v858 = vunpack.c.l.b16 %v819
      %v859 = vunpack.c.l.b16 %v820
      %v860 = vunpack.c.l.b16 %v821
      %v861 = vunpack.c.l.b16 %v822
      %v862 = vunpack.c.l.b16 %v823
      %v863 = vunpack.c.l.b16 %v824
      %v864 = vunpack.c.l.b16 %v825
      %v865 = vunpack.c.l.b16 %v826
      %v866 = vunpack.c.l.b16 %v827
      %v867 = vunpack.c.l.b16 %v828
      %v868 = vunpack.c.l.b16 %v829
      %v869 = vunpack.c.l.b16 %v830
      %v870 = vpack.c.b16 %v855, %v854
      %v871 = vpack.c.b16 %v857, %v856
      %v872 = vpack.c.b16 %v859, %v858
      %v873 = vpack.c.b16 %v861, %v860
      %v874 = vpack.c.b16 %v863, %v862
      %v875 = vpack.c.b16 %v865, %v864
      %v876 = vpack.c.b16 %v867, %v866
      %v877 = vpack.c.b16 %v869, %v868
      %886 = vmatprep.subr.bf16.mxu0 0
      %887 = vmatpush1.bf16.msra.mxu0 %v870
      %888 = vmatprep.subr.bf16.mxu0 0
      %889 = vmatpush1.bf16.msra.mxu0 %v871
      %890 = vmatprep.subr.bf16.mxu0 0
      %891 = vmatpush1.bf16.msra.mxu0 %v872
      %892 = vmatprep.subr.bf16.mxu0 0
      %893 = vmatpush1.bf16.msra.mxu0 %v873
      %894 = vmatprep.subr.bf16.mxu0 0
      %895 = vmatpush1.bf16.msra.mxu0 %v874
      %896 = vmatprep.subr.bf16.mxu0 0
      %897 = vmatpush1.bf16.msra.mxu0 %v875
      %898 = vmatprep.subr.bf16.mxu0 0
      %899 = vmatpush1.bf16.msra.mxu0 %v876
      %900 = vmatprep.subr.bf16.mxu0 0
      %901 = vmatpush1.bf16.msra.mxu0 %v877
      %902 = vmatprep.subr.bf16.mxu0 0
      %903 = vmatpush1.bf16.msra.mxu0 0
      %904 = vmatprep.subr.bf16.mxu0 0
      %905 = vmatpush1.bf16.msra.mxu0 0
      %906 = vmatprep.subr.bf16.mxu0 0
      %907 = vmatpush1.bf16.msra.mxu0 0
      %908 = vmatprep.subr.bf16.mxu0 0
      %909 = vmatpush1.bf16.msra.mxu0 0
      %910 = vmatprep.subr.bf16.mxu0 0
      %911 = vmatpush1.bf16.msra.mxu0 0
      %912 = vmatprep.subr.bf16.mxu0 0
      %913 = vmatpush1.bf16.msra.mxu0 0
      %914 = vmatprep.subr.bf16.mxu0 0
      %915 = vmatpush1.bf16.msra.mxu0 0
      %916 = vmatprep.subr.bf16.mxu0 0
      %917 = vmatpush1.bf16.msra.mxu0 0
      %918 = vmatprep.mubr.bf16.mxu0 0
      %919 = vmatmul.mubr.bf16.gmra.mrb[0].mxu0 %v799
      %v920 = vpop.f32.mrb[0].mxu0
      %v921 = vadd.f32 %v836, %v920
      %v922 = vpop.f32.mrb[0].mxu0
      %v923 = vpop.f32.mrb[0].mxu0
      %v924 = vadd.f32 %v836, %v923
      %v925 = vpop.f32.mrb[0].mxu0
      %926 = vmatprep.mubr.bf16.mxu0 0
      %927 = vmatmul.mubr.bf16.gmra.mrb[0].mxu0 %v800
      %v928 = vpop.f32.mrb[0].mxu0
      %v929 = vadd.f32 %v836, %v928
      %v930 = vpop.f32.mrb[0].mxu0
      %v931 = vpop.f32.mrb[0].mxu0
      %v932 = vadd.f32 %v836, %v931
      %v933 = vpop.f32.mrb[0].mxu0
      %934 = vmatprep.mubr.bf16.mxu0 0
      %935 = vmatmul.mubr.bf16.gmra.mrb[0].mxu0 %v801
      %v936 = vpop.f32.mrb[0].mxu0
      %v937 = vadd.f32 %v836, %v936
      %v938 = vpop.f32.mrb[0].mxu0
      %v939 = vpop.f32.mrb[0].mxu0
      %v940 = vadd.f32 %v836, %v939
      %v941 = vpop.f32.mrb[0].mxu0
      %942 = vmatprep.mubr.bf16.mxu0 0
      %943 = vmatmul.mubr.bf16.gmra.mrb[0].mxu0 %v802
      %v944 = vpop.f32.mrb[0].mxu0
      %v945 = vadd.f32 %v836, %v944
      %v946 = vpop.f32.mrb[0].mxu0
      %v947 = vpop.f32.mrb[0].mxu0
      %v948 = vadd.f32 %v836, %v947
      %v949 = vpop.f32.mrb[0].mxu0
      %950 = vmatprep.mubr.bf16.mxu0 0
      %951 = vmatmul.mubr.bf16.gmra.mrb[0].mxu0 %v803
      %v952 = vpop.f32.mrb[0].mxu0
      %v953 = vadd.f32 %v836, %v952
      %v954 = vpop.f32.mrb[0].mxu0
      %v955 = vpop.f32.mrb[0].mxu0
      %v956 = vadd.f32 %v836, %v955
      %v957 = vpop.f32.mrb[0].mxu0
      %958 = vmatprep.mubr.bf16.mxu0 0
      %959 = vmatmul.mubr.bf16.gmra.mrb[0].mxu0 %v804
      %v960 = vpop.f32.mrb[0].mxu0
      %v961 = vadd.f32 %v836, %v960
      %v962 = vpop.f32.mrb[0].mxu0
      %v963 = vpop.f32.mrb[0].mxu0
      %v964 = vadd.f32 %v836, %v963
      %v965 = vpop.f32.mrb[0].mxu0
      %966 = vmatprep.mubr.bf16.mxu0 0
      %967 = vmatmul.mubr.bf16.gmra.mrb[0].mxu0 %v805
      %v968 = vpop.f32.mrb[0].mxu0
      %v969 = vadd.f32 %v836, %v968
      %v970 = vpop.f32.mrb[0].mxu0
      %v971 = vpop.f32.mrb[0].mxu0
      %v972 = vadd.f32 %v836, %v971
      %v973 = vpop.f32.mrb[0].mxu0
      %974 = vmatprep.mubr.bf16.mxu0 0
      %975 = vmatmul.mubr.bf16.gmra.mrb[0].mxu0 %v806
      %v976 = vpop.f32.mrb[0].mxu0
      %v977 = vadd.f32 %v836, %v976
      %v978 = vpop.f32.mrb[0].mxu0
      %v979 = vpop.f32.mrb[0].mxu0
      %v980 = vadd.f32 %v836, %v979
      %v981 = vpop.f32.mrb[0].mxu0
      %982 = vmatprep.mubr.bf16.mxu0 0
      %983 = vmatmul.mubr.bf16.gmra.mrb[0].mxu0 %v807
      %v984 = vpop.f32.mrb[0].mxu0
      %v985 = vadd.f32 %v836, %v984
      %v986 = vpop.f32.mrb[0].mxu0
      %v987 = vpop.f32.mrb[0].mxu0
      %v988 = vadd.f32 %v836, %v987
      %v989 = vpop.f32.mrb[0].mxu0
      %990 = vmatprep.mubr.bf16.mxu0 0
      %991 = vmatmul.mubr.bf16.gmra.mrb[0].mxu0 %v808
      %v992 = vpop.f32.mrb[0].mxu0
      %v993 = vadd.f32 %v836, %v992
      %v994 = vpop.f32.mrb[0].mxu0
      %v995 = vpop.f32.mrb[0].mxu0
      %v996 = vadd.f32 %v836, %v995
      %v997 = vpop.f32.mrb[0].mxu0
      %998 = vmatprep.mubr.bf16.mxu0 0
      %999 = vmatmul.mubr.bf16.gmra.mrb[0].mxu0 %v809
      %v1000 = vpop.f32.mrb[0].mxu0
      %v1001 = vadd.f32 %v836, %v1000
      %v1002 = vpop.f32.mrb[0].mxu0
      %v1003 = vpop.f32.mrb[0].mxu0
      %v1004 = vadd.f32 %v836, %v1003
      %v1005 = vpop.f32.mrb[0].mxu0
      %1006 = vmatprep.mubr.bf16.mxu0 0
      %1007 = vmatmul.mubr.bf16.gmra.mrb[0].mxu0 %v810
      %v1008 = vpop.f32.mrb[0].mxu0
      %v1009 = vadd.f32 %v836, %v1008
      %v1010 = vpop.f32.mrb[0].mxu0
      %v1011 = vpop.f32.mrb[0].mxu0
      %v1012 = vadd.f32 %v836, %v1011
      %v1013 = vpop.f32.mrb[0].mxu0
      %1014 = vmatprep.mubr.bf16.mxu0 0
      %1015 = vmatmul.mubr.bf16.gmra.mrb[0].mxu0 %v811
      %v1016 = vpop.f32.mrb[0].mxu0
      %v1017 = vadd.f32 %v836, %v1016
      %v1018 = vpop.f32.mrb[0].mxu0
      %v1019 = vpop.f32.mrb[0].mxu0
      %v1020 = vadd.f32 %v836, %v1019
      %v1021 = vpop.f32.mrb[0].mxu0
      %1022 = vmatprep.mubr.bf16.mxu0 0
      %1023 = vmatmul.mubr.bf16.gmra.mrb[0].mxu0 %v812
      %v1024 = vpop.f32.mrb[0].mxu0
      %v1025 = vadd.f32 %v836, %v1024
      %v1026 = vpop.f32.mrb[0].mxu0
      %v1027 = vpop.f32.mrb[0].mxu0
      %v1028 = vadd.f32 %v836, %v1027
      %v1029 = vpop.f32.mrb[0].mxu0
      %1030 = vmatprep.mubr.bf16.mxu0 0
      %1031 = vmatmul.mubr.bf16.gmra.mrb[0].mxu0 %v813
      %v1032 = vpop.f32.mrb[0].mxu0
      %v1033 = vadd.f32 %v836, %v1032
      %v1034 = vpop.f32.mrb[0].mxu0
      %v1035 = vpop.f32.mrb[0].mxu0
      %v1036 = vadd.f32 %v836, %v1035
      %v1037 = vpop.f32.mrb[0].mxu0
      %1038 = vmatprep.mubr.bf16.mxu0 0
      %1039 = vmatmul.mubr.bf16.gmra.mrb[0].mxu0 %v814
      %v1040 = vpop.f32.mrb[0].mxu0
      %v1041 = vadd.f32 %v836, %v1040
      %v1042 = vpop.f32.mrb[0].mxu0
      %v1043 = vpop.f32.mrb[0].mxu0
      %v1044 = vadd.f32 %v836, %v1043
      %v1045 = vpop.f32.mrb[0].mxu0
      %1046 = vdwg.mxu0
      %v1047 = vmax.f32 %v921, 0.0
      %v1048 = vmax.f32 %v924, 0.0
      %v1049 = vmax.f32 %v929, 0.0
      %v1050 = vmax.f32 %v932, 0.0
      %v1051 = vmax.f32 %v937, 0.0
      %v1052 = vmax.f32 %v940, 0.0
      %v1053 = vmax.f32 %v945, 0.0
      %v1054 = vmax.f32 %v948, 0.0
      %v1055 = vmax.f32 %v953, 0.0
      %v1056 = vmax.f32 %v956, 0.0
      %v1057 = vmax.f32 %v961, 0.0
      %v1058 = vmax.f32 %v964, 0.0
      %v1059 = vmax.f32 %v969, 0.0
      %v1060 = vmax.f32 %v972, 0.0
      %v1061 = vmax.f32 %v977, 0.0
      %v1062 = vmax.f32 %v980, 0.0
      %v1063 = vmax.f32 %v985, 0.0
      %v1064 = vmax.f32 %v988, 0.0
      %v1065 = vmax.f32 %v993, 0.0
      %v1066 = vmax.f32 %v996, 0.0
      %v1067 = vmax.f32 %v1001, 0.0
      %v1068 = vmax.f32 %v1004, 0.0
      %v1069 = vmax.f32 %v1009, 0.0
      %v1070 = vmax.f32 %v1012, 0.0
      %v1071 = vmax.f32 %v1017, 0.0
      %v1072 = vmax.f32 %v1020, 0.0
      %v1073 = vmax.f32 %v1025, 0.0
      %v1074 = vmax.f32 %v1028, 0.0
      %v1075 = vmax.f32 %v1033, 0.0
      %v1076 = vmax.f32 %v1036, 0.0
      %v1077 = vmax.f32 %v1041, 0.0
      %v1078 = vmax.f32 %v1044, 0.0
      %v1079 = vpack.c.bf16 %v1048, %v1047
      %v1080 = vpack.c.bf16 %v1050, %v1049
      %v1081 = vpack.c.bf16 %v1052, %v1051
      %v1082 = vpack.c.bf16 %v1054, %v1053
      %v1083 = vpack.c.bf16 %v1056, %v1055
      %v1084 = vpack.c.bf16 %v1058, %v1057
      %v1085 = vpack.c.bf16 %v1060, %v1059
      %v1086 = vpack.c.bf16 %v1062, %v1061
      %v1087 = vpack.c.bf16 %v1064, %v1063
      %v1088 = vpack.c.bf16 %v1066, %v1065
      %v1089 = vpack.c.bf16 %v1068, %v1067
      %v1090 = vpack.c.bf16 %v1070, %v1069
      %v1091 = vpack.c.bf16 %v1072, %v1071
      %v1092 = vpack.c.bf16 %v1074, %v1073
      %v1093 = vpack.c.bf16 %v1076, %v1075
      %v1094 = vpack.c.bf16 %v1078, %v1077
      %v1095 = vld [vmem:[%s5] sm:$0xf]
      %v1096 = vld [vmem:[%s5 + $0x4] sm:$0xf]
      %v1097 = vld [vmem:[%s5 + $0x8] sm:$0xf]
      %v1098 = vld [vmem:[%s5 + $0xc] sm:$0xf]
      %v1099 = vld [vmem:[%s5 + $0x10] sm:$0xf]
      %v1100 = vld [vmem:[%s5 + $0x14] sm:$0xf]
      %v1101 = vld [vmem:[%s5 + $0x18] sm:$0xf]
      %v1102 = vld [vmem:[%s5 + $0x1c] sm:$0xf]
      %v1103 = vld [vmem:[%s5 + $0x20] sm:$0xf]
      %v1104 = vld [vmem:[%s5 + $0x24] sm:$0xf]
      %v1105 = vld [vmem:[%s5 + $0x28] sm:$0xf]
      %v1106 = vld [vmem:[%s5 + $0x2c] sm:$0xf]
      %v1107 = vld [vmem:[%s5 + $0x30] sm:$0xf]
      %v1108 = vld [vmem:[%s5 + $0x34] sm:$0xf]
      %v1109 = vld [vmem:[%s5 + $0x38] sm:$0xf]
      %v1110 = vld [vmem:[%s5 + $0x3c] sm:$0xf]
      %v1111 = vld [vmem:[%s6] sm:$0x1]
      %v1113 = vlaneseq
      %v1114 = vshrl.u32 %v1113, 7
      %v1115 = vsub.s32 0, %v1114
      %v1116 = vrot.slane %v1111, %v1115
      %v1134 = vunpack.c.l.b16 %v1095
      %v1135 = vunpack.c.l.b16 %v1096
      %v1136 = vunpack.c.l.b16 %v1097
      %v1137 = vunpack.c.l.b16 %v1098
      %v1138 = vunpack.c.l.b16 %v1099
      %v1139 = vunpack.c.l.b16 %v1100
      %v1140 = vunpack.c.l.b16 %v1101
      %v1141 = vunpack.c.l.b16 %v1102
      %v1142 = vunpack.c.l.b16 %v1103
      %v1143 = vunpack.c.l.b16 %v1104
      %v1144 = vunpack.c.l.b16 %v1105
      %v1145 = vunpack.c.l.b16 %v1106
      %v1146 = vunpack.c.l.b16 %v1107
      %v1147 = vunpack.c.l.b16 %v1108
      %v1148 = vunpack.c.l.b16 %v1109
      %v1149 = vunpack.c.l.b16 %v1110
      %v1150 = vpack.c.b16 %v1135, %v1134
      %v1151 = vpack.c.b16 %v1137, %v1136
      %v1152 = vpack.c.b16 %v1139, %v1138
      %v1153 = vpack.c.b16 %v1141, %v1140
      %v1154 = vpack.c.b16 %v1143, %v1142
      %v1155 = vpack.c.b16 %v1145, %v1144
      %v1156 = vpack.c.b16 %v1147, %v1146
      %v1157 = vpack.c.b16 %v1149, %v1148
      %1166 = vmatprep.subr.bf16.mxu0 0
      %1167 = vmatpush1.bf16.msra.mxu0 %v1150
      %1168 = vmatprep.subr.bf16.mxu0 0
      %1169 = vmatpush1.bf16.msra.mxu0 %v1151
      %1170 = vmatprep.subr.bf16.mxu0 0
      %1171 = vmatpush1.bf16.msra.mxu0 %v1152
      %1172 = vmatprep.subr.bf16.mxu0 0
      %1173 = vmatpush1.bf16.msra.mxu0 %v1153
      %1174 = vmatprep.subr.bf16.mxu0 0
      %1175 = vmatpush1.bf16.msra.mxu0 %v1154
      %1176 = vmatprep.subr.bf16.mxu0 0
      %1177 = vmatpush1.bf16.msra.mxu0 %v1155
      %1178 = vmatprep.subr.bf16.mxu0 0
      %1179 = vmatpush1.bf16.msra.mxu0 %v1156
      %1180 = vmatprep.subr.bf16.mxu0 0
      %1181 = vmatpush1.bf16.msra.mxu0 %v1157
      %1182 = vmatprep.subr.bf16.mxu0 0
      %1183 = vmatpush1.bf16.msra.mxu0 0
      %1184 = vmatprep.subr.bf16.mxu0 0
      %1185 = vmatpush1.bf16.msra.mxu0 0
      %1186 = vmatprep.subr.bf16.mxu0 0
      %1187 = vmatpush1.bf16.msra.mxu0 0
      %1188 = vmatprep.subr.bf16.mxu0 0
      %1189 = vmatpush1.bf16.msra.mxu0 0
      %1190 = vmatprep.subr.bf16.mxu0 0
      %1191 = vmatpush1.bf16.msra.mxu0 0
      %1192 = vmatprep.subr.bf16.mxu0 0
      %1193 = vmatpush1.bf16.msra.mxu0 0
      %1194 = vmatprep.subr.bf16.mxu0 0
      %1195 = vmatpush1.bf16.msra.mxu0 0
      %1196 = vmatprep.subr.bf16.mxu0 0
      %1197 = vmatpush1.bf16.msra.mxu0 0
      %1198 = vmatprep.mubr.bf16.mxu0 0
      %1199 = vmatmul.mubr.bf16.gmra.mrb[0].mxu0 %v1079
      %v1200 = vpop.f32.mrb[0].mxu0
      %v1201 = vadd.f32 %v1116, %v1200
      %v1202 = vpop.f32.mrb[0].mxu0
      %v1203 = vpop.f32.mrb[0].mxu0
      %v1204 = vadd.f32 %v1116, %v1203
      %v1205 = vpop.f32.mrb[0].mxu0
      %1206 = vmatprep.mubr.bf16.mxu0 0
      %1207 = vmatmul.mubr.bf16.gmra.mrb[0].mxu0 %v1080
      %v1208 = vpop.f32.mrb[0].mxu0
      %v1209 = vadd.f32 %v1116, %v1208
      %v1210 = vpop.f32.mrb[0].mxu0
      %v1211 = vpop.f32.mrb[0].mxu0
      %v1212 = vadd.f32 %v1116, %v1211
      %v1213 = vpop.f32.mrb[0].mxu0
      %1214 = vmatprep.mubr.bf16.mxu0 0
      %1215 = vmatmul.mubr.bf16.gmra.mrb[0].mxu0 %v1081
      %v1216 = vpop.f32.mrb[0].mxu0
      %v1217 = vadd.f32 %v1116, %v1216
      %v1218 = vpop.f32.mrb[0].mxu0
      %v1219 = vpop.f32.mrb[0].mxu0
      %v1220 = vadd.f32 %v1116, %v1219
      %v1221 = vpop.f32.mrb[0].mxu0
      %1222 = vmatprep.mubr.bf16.mxu0 0
      %1223 = vmatmul.mubr.bf16.gmra.mrb[0].mxu0 %v1082
      %v1224 = vpop.f32.mrb[0].mxu0
      %v1225 = vadd.f32 %v1116, %v1224
      %v1226 = vpop.f32.mrb[0].mxu0
      %v1227 = vpop.f32.mrb[0].mxu0
      %v1228 = vadd.f32 %v1116, %v1227
      %v1229 = vpop.f32.mrb[0].mxu0
      %1230 = vmatprep.mubr.bf16.mxu0 0
      %1231 = vmatmul.mubr.bf16.gmra.mrb[0].mxu0 %v1083
      %v1232 = vpop.f32.mrb[0].mxu0
      %v1233 = vadd.f32 %v1116, %v1232
      %v1234 = vpop.f32.mrb[0].mxu0
      %v1235 = vpop.f32.mrb[0].mxu0
      %v1236 = vadd.f32 %v1116, %v1235
      %v1237 = vpop.f32.mrb[0].mxu0
      %1238 = vmatprep.mubr.bf16.mxu0 0
      %1239 = vmatmul.mubr.bf16.gmra.mrb[0].mxu0 %v1084
      %v1240 = vpop.f32.mrb[0].mxu0
      %v1241 = vadd.f32 %v1116, %v1240
      %v1242 = vpop.f32.mrb[0].mxu0
      %v1243 = vpop.f32.mrb[0].mxu0
      %v1244 = vadd.f32 %v1116, %v1243
      %v1245 = vpop.f32.mrb[0].mxu0
      %1246 = vmatprep.mubr.bf16.mxu0 0
      %1247 = vmatmul.mubr.bf16.gmra.mrb[0].mxu0 %v1085
      %v1248 = vpop.f32.mrb[0].mxu0
      %v1249 = vadd.f32 %v1116, %v1248
      %v1250 = vpop.f32.mrb[0].mxu0
      %v1251 = vpop.f32.mrb[0].mxu0
      %v1252 = vadd.f32 %v1116, %v1251
      %v1253 = vpop.f32.mrb[0].mxu0
      %1254 = vmatprep.mubr.bf16.mxu0 0
      %1255 = vmatmul.mubr.bf16.gmra.mrb[0].mxu0 %v1086
      %v1256 = vpop.f32.mrb[0].mxu0
      %v1257 = vadd.f32 %v1116, %v1256
      %v1258 = vpop.f32.mrb[0].mxu0
      %v1259 = vpop.f32.mrb[0].mxu0
      %v1260 = vadd.f32 %v1116, %v1259
      %v1261 = vpop.f32.mrb[0].mxu0
      %1262 = vmatprep.mubr.bf16.mxu0 0
      %1263 = vmatmul.mubr.bf16.gmra.mrb[0].mxu0 %v1087
      %v1264 = vpop.f32.mrb[0].mxu0
      %v1265 = vadd.f32 %v1116, %v1264
      %v1266 = vpop.f32.mrb[0].mxu0
      %v1267 = vpop.f32.mrb[0].mxu0
      %v1268 = vadd.f32 %v1116, %v1267
      %v1269 = vpop.f32.mrb[0].mxu0
      %1270 = vmatprep.mubr.bf16.mxu0 0
      %1271 = vmatmul.mubr.bf16.gmra.mrb[0].mxu0 %v1088
      %v1272 = vpop.f32.mrb[0].mxu0
      %v1273 = vadd.f32 %v1116, %v1272
      %v1274 = vpop.f32.mrb[0].mxu0
      %v1275 = vpop.f32.mrb[0].mxu0
      %v1276 = vadd.f32 %v1116, %v1275
      %v1277 = vpop.f32.mrb[0].mxu0
      %1278 = vmatprep.mubr.bf16.mxu0 0
      %1279 = vmatmul.mubr.bf16.gmra.mrb[0].mxu0 %v1089
      %v1280 = vpop.f32.mrb[0].mxu0
      %v1281 = vadd.f32 %v1116, %v1280
      %v1282 = vpop.f32.mrb[0].mxu0
      %v1283 = vpop.f32.mrb[0].mxu0
      %v1284 = vadd.f32 %v1116, %v1283
      %v1285 = vpop.f32.mrb[0].mxu0
      %1286 = vmatprep.mubr.bf16.mxu0 0
      %1287 = vmatmul.mubr.bf16.gmra.mrb[0].mxu0 %v1090
      %v1288 = vpop.f32.mrb[0].mxu0
      %v1289 = vadd.f32 %v1116, %v1288
      %v1290 = vpop.f32.mrb[0].mxu0
      %v1291 = vpop.f32.mrb[0].mxu0
      %v1292 = vadd.f32 %v1116, %v1291
      %v1293 = vpop.f32.mrb[0].mxu0
      %1294 = vmatprep.mubr.bf16.mxu0 0
      %1295 = vmatmul.mubr.bf16.gmra.mrb[0].mxu0 %v1091
      %v1296 = vpop.f32.mrb[0].mxu0
      %v1297 = vadd.f32 %v1116, %v1296
      %v1298 = vpop.f32.mrb[0].mxu0
      %v1299 = vpop.f32.mrb[0].mxu0
      %v1300 = vadd.f32 %v1116, %v1299
      %v1301 = vpop.f32.mrb[0].mxu0
      %1302 = vmatprep.mubr.bf16.mxu0 0
      %1303 = vmatmul.mubr.bf16.gmra.mrb[0].mxu0 %v1092
      %v1304 = vpop.f32.mrb[0].mxu0
      %v1305 = vadd.f32 %v1116, %v1304
      %v1306 = vpop.f32.mrb[0].mxu0
      %v1307 = vpop.f32.mrb[0].mxu0
      %v1308 = vadd.f32 %v1116, %v1307
      %v1309 = vpop.f32.mrb[0].mxu0
      %1310 = vmatprep.mubr.bf16.mxu0 0
      %1311 = vmatmul.mubr.bf16.gmra.mrb[0].mxu0 %v1093
      %v1312 = vpop.f32.mrb[0].mxu0
      %v1313 = vadd.f32 %v1116, %v1312
      %v1314 = vpop.f32.mrb[0].mxu0
      %v1315 = vpop.f32.mrb[0].mxu0
      %v1316 = vadd.f32 %v1116, %v1315
      %v1317 = vpop.f32.mrb[0].mxu0
      %1318 = vmatprep.mubr.bf16.mxu0 0
      %1319 = vmatmul.mubr.bf16.gmra.mrb[0].mxu0 %v1094
      %v1320 = vpop.f32.mrb[0].mxu0
      %v1321 = vadd.f32 %v1116, %v1320
      %v1322 = vpop.f32.mrb[0].mxu0
      %v1323 = vpop.f32.mrb[0].mxu0
      %v1324 = vadd.f32 %v1116, %v1323
      %v1325 = vpop.f32.mrb[0].mxu0
      %1326 = vdwg.mxu0
      %v1327 = vmax.f32 %v1201, 0.0
      %v1328 = vmax.f32 %v1204, 0.0
      %v1329 = vmax.f32 %v1209, 0.0
      %v1330 = vmax.f32 %v1212, 0.0
      %v1331 = vmax.f32 %v1217, 0.0
      %v1332 = vmax.f32 %v1220, 0.0
      %v1333 = vmax.f32 %v1225, 0.0
      %v1334 = vmax.f32 %v1228, 0.0
      %v1335 = vmax.f32 %v1233, 0.0
      %v1336 = vmax.f32 %v1236, 0.0
      %v1337 = vmax.f32 %v1241, 0.0
      %v1338 = vmax.f32 %v1244, 0.0
      %v1339 = vmax.f32 %v1249, 0.0
      %v1340 = vmax.f32 %v1252, 0.0
      %v1341 = vmax.f32 %v1257, 0.0
      %v1342 = vmax.f32 %v1260, 0.0
      %v1343 = vmax.f32 %v1265, 0.0
      %v1344 = vmax.f32 %v1268, 0.0
      %v1345 = vmax.f32 %v1273, 0.0
      %v1346 = vmax.f32 %v1276, 0.0
      %v1347 = vmax.f32 %v1281, 0.0
      %v1348 = vmax.f32 %v1284, 0.0
      %v1349 = vmax.f32 %v1289, 0.0
      %v1350 = vmax.f32 %v1292, 0.0
      %v1351 = vmax.f32 %v1297, 0.0
      %v1352 = vmax.f32 %v1300, 0.0
      %v1353 = vmax.f32 %v1305, 0.0
      %v1354 = vmax.f32 %v1308, 0.0
      %v1355 = vmax.f32 %v1313, 0.0
      %v1356 = vmax.f32 %v1316, 0.0
      %v1357 = vmax.f32 %v1321, 0.0
      %v1358 = vmax.f32 %v1324, 0.0
      %vm1359 = vcmask 80896
      %1360 = vst.msk [vmem:[%s483] sm:$0xff] %vm1359, %v1327
      %1361 = vst.msk [vmem:[%s483 + $0x8] sm:$0xff] %vm1359, %v1328
      %1362 = vst.msk [vmem:[%s483 + $0x10] sm:$0xff] %vm1359, %v1329
      %1363 = vst.msk [vmem:[%s483 + $0x18] sm:$0xff] %vm1359, %v1330
      %1364 = vst.msk [vmem:[%s483 + $0x20] sm:$0xff] %vm1359, %v1331
      %1365 = vst.msk [vmem:[%s483 + $0x28] sm:$0xff] %vm1359, %v1332
      %1366 = vst.msk [vmem:[%s483 + $0x30] sm:$0xff] %vm1359, %v1333
      %1367 = vst.msk [vmem:[%s483 + $0x38] sm:$0xff] %vm1359, %v1334
      %1368 = vst.msk [vmem:[%s483 + $0x40] sm:$0xff] %vm1359, %v1335
      %1369 = vst.msk [vmem:[%s483 + $0x48] sm:$0xff] %vm1359, %v1336
      %1370 = vst.msk [vmem:[%s483 + $0x50] sm:$0xff] %vm1359, %v1337
      %1371 = vst.msk [vmem:[%s483 + $0x58] sm:$0xff] %vm1359, %v1338
      %1372 = vst.msk [vmem:[%s483 + $0x60] sm:$0xff] %vm1359, %v1339
      %1373 = vst.msk [vmem:[%s483 + $0x68] sm:$0xff] %vm1359, %v1340
      %1374 = vst.msk [vmem:[%s483 + $0x70] sm:$0xff] %vm1359, %v1341
      %1375 = vst.msk [vmem:[%s483 + $0x78] sm:$0xff] %vm1359, %v1342
      %1376 = vst.msk [vmem:[%s483 + $0x80] sm:$0xff] %vm1359, %v1343
      %1377 = vst.msk [vmem:[%s483 + $0x88] sm:$0xff] %vm1359, %v1344
      %1378 = vst.msk [vmem:[%s483 + $0x90] sm:$0xff] %vm1359, %v1345
      %1379 = vst.msk [vmem:[%s483 + $0x98] sm:$0xff] %vm1359, %v1346
      %1380 = vst.msk [vmem:[%s483 + $0xa0] sm:$0xff] %vm1359, %v1347
      %1381 = vst.msk [vmem:[%s483 + $0xa8] sm:$0xff] %vm1359, %v1348
      %1382 = vst.msk [vmem:[%s483 + $0xb0] sm:$0xff] %vm1359, %v1349
      %1383 = vst.msk [vmem:[%s483 + $0xb8] sm:$0xff] %vm1359, %v1350
      %1384 = vst.msk [vmem:[%s483 + $0xc0] sm:$0xff] %vm1359, %v1351
      %1385 = vst.msk [vmem:[%s483 + $0xc8] sm:$0xff] %vm1359, %v1352
      %1386 = vst.msk [vmem:[%s483 + $0xd0] sm:$0xff] %vm1359, %v1353
      %1387 = vst.msk [vmem:[%s483 + $0xd8] sm:$0xff] %vm1359, %v1354
      %1388 = vst.msk [vmem:[%s483 + $0xe0] sm:$0xff] %vm1359, %v1355
      %1389 = vst.msk [vmem:[%s483 + $0xe8] sm:$0xff] %vm1359, %v1356
      %1390 = vst.msk [vmem:[%s483 + $0xf0] sm:$0xff] %vm1359, %v1357
      %1391 = vst.msk [vmem:[%s483 + $0xf8] sm:$0xff] %vm1359, %v1358
      %v1392 = vpack.c.bf16 %v1328, %v1327
      %v1393 = vpack.c.bf16 %v1330, %v1329
      %v1394 = vpack.c.bf16 %v1332, %v1331
      %v1395 = vpack.c.bf16 %v1334, %v1333
      %v1396 = vpack.c.bf16 %v1336, %v1335
      %v1397 = vpack.c.bf16 %v1338, %v1337
      %v1398 = vpack.c.bf16 %v1340, %v1339
      %v1399 = vpack.c.bf16 %v1342, %v1341
      %v1400 = vpack.c.bf16 %v1344, %v1343
      %v1401 = vpack.c.bf16 %v1346, %v1345
      %v1402 = vpack.c.bf16 %v1348, %v1347
      %v1403 = vpack.c.bf16 %v1350, %v1349
      %v1404 = vpack.c.bf16 %v1352, %v1351
      %v1405 = vpack.c.bf16 %v1354, %v1353
      %v1406 = vpack.c.bf16 %v1356, %v1355
      %v1407 = vpack.c.bf16 %v1358, %v1357
      %v1408 = vld [vmem:[%s7] sm:$0xf]
      %v1409 = vld [vmem:[%s7 + $0x4] sm:$0xf]
      %v1410 = vld [vmem:[%s7 + $0x8] sm:$0xf]
      %v1411 = vld [vmem:[%s7 + $0xc] sm:$0xf]
      %v1412 = vld [vmem:[%s7 + $0x10] sm:$0xf]
      %v1413 = vld [vmem:[%s7 + $0x14] sm:$0xf]
      %v1414 = vld [vmem:[%s7 + $0x18] sm:$0xf]
      %v1415 = vld [vmem:[%s7 + $0x1c] sm:$0xf]
      %v1416 = vld [vmem:[%s7 + $0x20] sm:$0xf]
      %v1417 = vld [vmem:[%s7 + $0x24] sm:$0xf]
      %v1418 = vld [vmem:[%s7 + $0x28] sm:$0xf]
      %v1419 = vld [vmem:[%s7 + $0x2c] sm:$0xf]
      %v1420 = vld [vmem:[%s7 + $0x30] sm:$0xf]
      %v1421 = vld [vmem:[%s7 + $0x34] sm:$0xf]
      %v1422 = vld [vmem:[%s7 + $0x38] sm:$0xf]
      %v1423 = vld [vmem:[%s7 + $0x3c] sm:$0xf]
      %v1424 = vld [vmem:[%s8] sm:$0x1]
      %v1426 = vlaneseq
      %v1427 = vshrl.u32 %v1426, 7
      %v1428 = vsub.s32 0, %v1427
      %v1429 = vrot.slane %v1424, %v1428
      %v1447 = vunpack.c.l.b16 %v1408
      %v1448 = vunpack.c.l.b16 %v1409
      %v1449 = vunpack.c.l.b16 %v1410
      %v1450 = vunpack.c.l.b16 %v1411
      %v1451 = vunpack.c.l.b16 %v1412
      %v1452 = vunpack.c.l.b16 %v1413
      %v1453 = vunpack.c.l.b16 %v1414
      %v1454 = vunpack.c.l.b16 %v1415
      %v1455 = vunpack.c.l.b16 %v1416
      %v1456 = vunpack.c.l.b16 %v1417
      %v1457 = vunpack.c.l.b16 %v1418
      %v1458 = vunpack.c.l.b16 %v1419
      %v1459 = vunpack.c.l.b16 %v1420
      %v1460 = vunpack.c.l.b16 %v1421
      %v1461 = vunpack.c.l.b16 %v1422
      %v1462 = vunpack.c.l.b16 %v1423
      %v1463 = vpack.c.b16 %v1448, %v1447
      %v1464 = vpack.c.b16 %v1450, %v1449
      %v1465 = vpack.c.b16 %v1452, %v1451
      %v1466 = vpack.c.b16 %v1454, %v1453
      %v1467 = vpack.c.b16 %v1456, %v1455
      %v1468 = vpack.c.b16 %v1458, %v1457
      %v1469 = vpack.c.b16 %v1460, %v1459
      %v1470 = vpack.c.b16 %v1462, %v1461
      %1479 = vmatprep.subr.bf16.mxu0 0
      %1480 = vmatpush1.bf16.msra.mxu0 %v1463
      %1481 = vmatprep.subr.bf16.mxu0 0
      %1482 = vmatpush1.bf16.msra.mxu0 %v1464
      %1483 = vmatprep.subr.bf16.mxu0 0
      %1484 = vmatpush1.bf16.msra.mxu0 %v1465
      %1485 = vmatprep.subr.bf16.mxu0 0
      %1486 = vmatpush1.bf16.msra.mxu0 %v1466
      %1487 = vmatprep.subr.bf16.mxu0 0
      %1488 = vmatpush1.bf16.msra.mxu0 %v1467
      %1489 = vmatprep.subr.bf16.mxu0 0
      %1490 = vmatpush1.bf16.msra.mxu0 %v1468
      %1491 = vmatprep.subr.bf16.mxu0 0
      %1492 = vmatpush1.bf16.msra.mxu0 %v1469
      %1493 = vmatprep.subr.bf16.mxu0 0
      %1494 = vmatpush1.bf16.msra.mxu0 %v1470
      %1495 = vmatprep.subr.bf16.mxu0 0
      %1496 = vmatpush1.bf16.msra.mxu0 0
      %1497 = vmatprep.subr.bf16.mxu0 0
      %1498 = vmatpush1.bf16.msra.mxu0 0
      %1499 = vmatprep.subr.bf16.mxu0 0
      %1500 = vmatpush1.bf16.msra.mxu0 0
      %1501 = vmatprep.subr.bf16.mxu0 0
      %1502 = vmatpush1.bf16.msra.mxu0 0
      %1503 = vmatprep.subr.bf16.mxu0 0
      %1504 = vmatpush1.bf16.msra.mxu0 0
      %1505 = vmatprep.subr.bf16.mxu0 0
      %1506 = vmatpush1.bf16.msra.mxu0 0
      %1507 = vmatprep.subr.bf16.mxu0 0
      %1508 = vmatpush1.bf16.msra.mxu0 0
      %1509 = vmatprep.subr.bf16.mxu0 0
      %1510 = vmatpush1.bf16.msra.mxu0 0
      %1511 = vmatprep.mubr.bf16.mxu0 0
      %1512 = vmatmul.mubr.bf16.gmra.mrb[0].mxu0 %v1392
      %v1513 = vpop.f32.mrb[0].mxu0
      %v1514 = vadd.f32 %v1429, %v1513
      %v1515 = vpop.f32.mrb[0].mxu0
      %v1516 = vpop.f32.mrb[0].mxu0
      %v1517 = vadd.f32 %v1429, %v1516
      %v1518 = vpop.f32.mrb[0].mxu0
      %1519 = vmatprep.mubr.bf16.mxu0 0
      %1520 = vmatmul.mubr.bf16.gmra.mrb[0].mxu0 %v1393
      %v1521 = vpop.f32.mrb[0].mxu0
      %v1522 = vadd.f32 %v1429, %v1521
      %v1523 = vpop.f32.mrb[0].mxu0
      %v1524 = vpop.f32.mrb[0].mxu0
      %v1525 = vadd.f32 %v1429, %v1524
      %v1526 = vpop.f32.mrb[0].mxu0
      %1527 = vmatprep.mubr.bf16.mxu0 0
      %1528 = vmatmul.mubr.bf16.gmra.mrb[0].mxu0 %v1394
      %v1529 = vpop.f32.mrb[0].mxu0
      %v1530 = vadd.f32 %v1429, %v1529
      %v1531 = vpop.f32.mrb[0].mxu0
      %v1532 = vpop.f32.mrb[0].mxu0
      %v1533 = vadd.f32 %v1429, %v1532
      %v1534 = vpop.f32.mrb[0].mxu0
      %1535 = vmatprep.mubr.bf16.mxu0 0
      %1536 = vmatmul.mubr.bf16.gmra.mrb[0].mxu0 %v1395
      %v1537 = vpop.f32.mrb[0].mxu0
      %v1538 = vadd.f32 %v1429, %v1537
      %v1539 = vpop.f32.mrb[0].mxu0
      %v1540 = vpop.f32.mrb[0].mxu0
      %v1541 = vadd.f32 %v1429, %v1540
      %v1542 = vpop.f32.mrb[0].mxu0
      %1543 = vmatprep.mubr.bf16.mxu0 0
      %1544 = vmatmul.mubr.bf16.gmra.mrb[0].mxu0 %v1396
      %v1545 = vpop.f32.mrb[0].mxu0
      %v1546 = vadd.f32 %v1429, %v1545
      %v1547 = vpop.f32.mrb[0].mxu0
      %v1548 = vpop.f32.mrb[0].mxu0
      %v1549 = vadd.f32 %v1429, %v1548
      %v1550 = vpop.f32.mrb[0].mxu0
      %1551 = vmatprep.mubr.bf16.mxu0 0
      %1552 = vmatmul.mubr.bf16.gmra.mrb[0].mxu0 %v1397
      %v1553 = vpop.f32.mrb[0].mxu0
      %v1554 = vadd.f32 %v1429, %v1553
      %v1555 = vpop.f32.mrb[0].mxu0
      %v1556 = vpop.f32.mrb[0].mxu0
      %v1557 = vadd.f32 %v1429, %v1556
      %v1558 = vpop.f32.mrb[0].mxu0
      %1559 = vmatprep.mubr.bf16.mxu0 0
      %1560 = vmatmul.mubr.bf16.gmra.mrb[0].mxu0 %v1398
      %v1561 = vpop.f32.mrb[0].mxu0
      %v1562 = vadd.f32 %v1429, %v1561
      %v1563 = vpop.f32.mrb[0].mxu0
      %v1564 = vpop.f32.mrb[0].mxu0
      %v1565 = vadd.f32 %v1429, %v1564
      %v1566 = vpop.f32.mrb[0].mxu0
      %1567 = vmatprep.mubr.bf16.mxu0 0
      %1568 = vmatmul.mubr.bf16.gmra.mrb[0].mxu0 %v1399
      %v1569 = vpop.f32.mrb[0].mxu0
      %v1570 = vadd.f32 %v1429, %v1569
      %v1571 = vpop.f32.mrb[0].mxu0
      %v1572 = vpop.f32.mrb[0].mxu0
      %v1573 = vadd.f32 %v1429, %v1572
      %v1574 = vpop.f32.mrb[0].mxu0
      %1575 = vmatprep.mubr.bf16.mxu0 0
      %1576 = vmatmul.mubr.bf16.gmra.mrb[0].mxu0 %v1400
      %v1577 = vpop.f32.mrb[0].mxu0
      %v1578 = vadd.f32 %v1429, %v1577
      %v1579 = vpop.f32.mrb[0].mxu0
      %v1580 = vpop.f32.mrb[0].mxu0
      %v1581 = vadd.f32 %v1429, %v1580
      %v1582 = vpop.f32.mrb[0].mxu0
      %1583 = vmatprep.mubr.bf16.mxu0 0
      %1584 = vmatmul.mubr.bf16.gmra.mrb[0].mxu0 %v1401
      %v1585 = vpop.f32.mrb[0].mxu0
      %v1586 = vadd.f32 %v1429, %v1585
      %v1587 = vpop.f32.mrb[0].mxu0
      %v1588 = vpop.f32.mrb[0].mxu0
      %v1589 = vadd.f32 %v1429, %v1588
      %v1590 = vpop.f32.mrb[0].mxu0
      %1591 = vmatprep.mubr.bf16.mxu0 0
      %1592 = vmatmul.mubr.bf16.gmra.mrb[0].mxu0 %v1402
      %v1593 = vpop.f32.mrb[0].mxu0
      %v1594 = vadd.f32 %v1429, %v1593
      %v1595 = vpop.f32.mrb[0].mxu0
      %v1596 = vpop.f32.mrb[0].mxu0
      %v1597 = vadd.f32 %v1429, %v1596
      %v1598 = vpop.f32.mrb[0].mxu0
      %1599 = vmatprep.mubr.bf16.mxu0 0
      %1600 = vmatmul.mubr.bf16.gmra.mrb[0].mxu0 %v1403
      %v1601 = vpop.f32.mrb[0].mxu0
      %v1602 = vadd.f32 %v1429, %v1601
      %v1603 = vpop.f32.mrb[0].mxu0
      %v1604 = vpop.f32.mrb[0].mxu0
      %v1605 = vadd.f32 %v1429, %v1604
      %v1606 = vpop.f32.mrb[0].mxu0
      %1607 = vmatprep.mubr.bf16.mxu0 0
      %1608 = vmatmul.mubr.bf16.gmra.mrb[0].mxu0 %v1404
      %v1609 = vpop.f32.mrb[0].mxu0
      %v1610 = vadd.f32 %v1429, %v1609
      %v1611 = vpop.f32.mrb[0].mxu0
      %v1612 = vpop.f32.mrb[0].mxu0
      %v1613 = vadd.f32 %v1429, %v1612
      %v1614 = vpop.f32.mrb[0].mxu0
      %1615 = vmatprep.mubr.bf16.mxu0 0
      %1616 = vmatmul.mubr.bf16.gmra.mrb[0].mxu0 %v1405
      %v1617 = vpop.f32.mrb[0].mxu0
      %v1618 = vadd.f32 %v1429, %v1617
      %v1619 = vpop.f32.mrb[0].mxu0
      %v1620 = vpop.f32.mrb[0].mxu0
      %v1621 = vadd.f32 %v1429, %v1620
      %v1622 = vpop.f32.mrb[0].mxu0
      %1623 = vmatprep.mubr.bf16.mxu0 0
      %1624 = vmatmul.mubr.bf16.gmra.mrb[0].mxu0 %v1406
      %v1625 = vpop.f32.mrb[0].mxu0
      %v1626 = vadd.f32 %v1429, %v1625
      %v1627 = vpop.f32.mrb[0].mxu0
      %v1628 = vpop.f32.mrb[0].mxu0
      %v1629 = vadd.f32 %v1429, %v1628
      %v1630 = vpop.f32.mrb[0].mxu0
      %1631 = vmatprep.mubr.bf16.mxu0 0
      %1632 = vmatmul.mubr.bf16.gmra.mrb[0].mxu0 %v1407
      %v1633 = vpop.f32.mrb[0].mxu0
      %v1634 = vadd.f32 %v1429, %v1633
      %v1635 = vpop.f32.mrb[0].mxu0
      %v1636 = vpop.f32.mrb[0].mxu0
      %v1637 = vadd.f32 %v1429, %v1636
      %v1638 = vpop.f32.mrb[0].mxu0
      %1639 = vdwg.mxu0
      %v1640 = vmax.f32 %v1514, 0.0
      %v1641 = vmax.f32 %v1517, 0.0
      %v1642 = vmax.f32 %v1522, 0.0
      %v1643 = vmax.f32 %v1525, 0.0
      %v1644 = vmax.f32 %v1530, 0.0
      %v1645 = vmax.f32 %v1533, 0.0
      %v1646 = vmax.f32 %v1538, 0.0
      %v1647 = vmax.f32 %v1541, 0.0
      %v1648 = vmax.f32 %v1546, 0.0
      %v1649 = vmax.f32 %v1549, 0.0
      %v1650 = vmax.f32 %v1554, 0.0
      %v1651 = vmax.f32 %v1557, 0.0
      %v1652 = vmax.f32 %v1562, 0.0
      %v1653 = vmax.f32 %v1565, 0.0
      %v1654 = vmax.f32 %v1570, 0.0
      %v1655 = vmax.f32 %v1573, 0.0
      %v1656 = vmax.f32 %v1578, 0.0
      %v1657 = vmax.f32 %v1581, 0.0
      %v1658 = vmax.f32 %v1586, 0.0
      %v1659 = vmax.f32 %v1589, 0.0
      %v1660 = vmax.f32 %v1594, 0.0
      %v1661 = vmax.f32 %v1597, 0.0
      %v1662 = vmax.f32 %v1602, 0.0
      %v1663 = vmax.f32 %v1605, 0.0
      %v1664 = vmax.f32 %v1610, 0.0
      %v1665 = vmax.f32 %v1613, 0.0
      %v1666 = vmax.f32 %v1618, 0.0
      %v1667 = vmax.f32 %v1621, 0.0
      %v1668 = vmax.f32 %v1626, 0.0
      %v1669 = vmax.f32 %v1629, 0.0
      %v1670 = vmax.f32 %v1634, 0.0
      %v1671 = vmax.f32 %v1637, 0.0
      %v1672 = vpack.c.bf16 %v1641, %v1640
      %v1673 = vpack.c.bf16 %v1643, %v1642
      %v1674 = vpack.c.bf16 %v1645, %v1644
      %v1675 = vpack.c.bf16 %v1647, %v1646
      %v1676 = vpack.c.bf16 %v1649, %v1648
      %v1677 = vpack.c.bf16 %v1651, %v1650
      %v1678 = vpack.c.bf16 %v1653, %v1652
      %v1679 = vpack.c.bf16 %v1655, %v1654
      %v1680 = vpack.c.bf16 %v1657, %v1656
      %v1681 = vpack.c.bf16 %v1659, %v1658
      %v1682 = vpack.c.bf16 %v1661, %v1660
      %v1683 = vpack.c.bf16 %v1663, %v1662
      %v1684 = vpack.c.bf16 %v1665, %v1664
      %v1685 = vpack.c.bf16 %v1667, %v1666
      %v1686 = vpack.c.bf16 %v1669, %v1668
      %v1687 = vpack.c.bf16 %v1671, %v1670
      %v1688 = vld [vmem:[%s9] sm:$0xf]
      %v1689 = vld [vmem:[%s9 + $0x4] sm:$0xf]
      %v1690 = vld [vmem:[%s9 + $0x8] sm:$0xf]
      %v1691 = vld [vmem:[%s9 + $0xc] sm:$0xf]
      %v1692 = vld [vmem:[%s9 + $0x10] sm:$0xf]
      %v1693 = vld [vmem:[%s9 + $0x14] sm:$0xf]
      %v1694 = vld [vmem:[%s9 + $0x18] sm:$0xf]
      %v1695 = vld [vmem:[%s9 + $0x1c] sm:$0xf]
      %v1696 = vld [vmem:[%s9 + $0x20] sm:$0xf]
      %v1697 = vld [vmem:[%s9 + $0x24] sm:$0xf]
      %v1698 = vld [vmem:[%s9 + $0x28] sm:$0xf]
      %v1699 = vld [vmem:[%s9 + $0x2c] sm:$0xf]
      %v1700 = vld [vmem:[%s9 + $0x30] sm:$0xf]
      %v1701 = vld [vmem:[%s9 + $0x34] sm:$0xf]
      %v1702 = vld [vmem:[%s9 + $0x38] sm:$0xf]
      %v1703 = vld [vmem:[%s9 + $0x3c] sm:$0xf]
      %v1704 = vld [vmem:[%s10] sm:$0x1]
      %v1706 = vlaneseq
      %v1707 = vshrl.u32 %v1706, 7
      %v1708 = vsub.s32 0, %v1707
      %v1709 = vrot.slane %v1704, %v1708
      %v1727 = vunpack.c.l.b16 %v1688
      %v1728 = vunpack.c.l.b16 %v1689
      %v1729 = vunpack.c.l.b16 %v1690
      %v1730 = vunpack.c.l.b16 %v1691
      %v1731 = vunpack.c.l.b16 %v1692
      %v1732 = vunpack.c.l.b16 %v1693
      %v1733 = vunpack.c.l.b16 %v1694
      %v1734 = vunpack.c.l.b16 %v1695
      %v1735 = vunpack.c.l.b16 %v1696
      %v1736 = vunpack.c.l.b16 %v1697
      %v1737 = vunpack.c.l.b16 %v1698
      %v1738 = vunpack.c.l.b16 %v1699
      %v1739 = vunpack.c.l.b16 %v1700
      %v1740 = vunpack.c.l.b16 %v1701
      %v1741 = vunpack.c.l.b16 %v1702
      %v1742 = vunpack.c.l.b16 %v1703
      %v1743 = vpack.c.b16 %v1728, %v1727
      %v1744 = vpack.c.b16 %v1730, %v1729
      %v1745 = vpack.c.b16 %v1732, %v1731
      %v1746 = vpack.c.b16 %v1734, %v1733
      %v1747 = vpack.c.b16 %v1736, %v1735
      %v1748 = vpack.c.b16 %v1738, %v1737
      %v1749 = vpack.c.b16 %v1740, %v1739
      %v1750 = vpack.c.b16 %v1742, %v1741
      %1759 = vmatprep.subr.bf16.mxu0 0
      %1760 = vmatpush1.bf16.msra.mxu0 %v1743
      %1761 = vmatprep.subr.bf16.mxu0 0
      %1762 = vmatpush1.bf16.msra.mxu0 %v1744
      %1763 = vmatprep.subr.bf16.mxu0 0
      %1764 = vmatpush1.bf16.msra.mxu0 %v1745
      %1765 = vmatprep.subr.bf16.mxu0 0
      %1766 = vmatpush1.bf16.msra.mxu0 %v1746
      %1767 = vmatprep.subr.bf16.mxu0 0
      %1768 = vmatpush1.bf16.msra.mxu0 %v1747
      %1769 = vmatprep.subr.bf16.mxu0 0
      %1770 = vmatpush1.bf16.msra.mxu0 %v1748
      %1771 = vmatprep.subr.bf16.mxu0 0
      %1772 = vmatpush1.bf16.msra.mxu0 %v1749
      %1773 = vmatprep.subr.bf16.mxu0 0
      %1774 = vmatpush1.bf16.msra.mxu0 %v1750
      %1775 = vmatprep.subr.bf16.mxu0 0
      %1776 = vmatpush1.bf16.msra.mxu0 0
      %1777 = vmatprep.subr.bf16.mxu0 0
      %1778 = vmatpush1.bf16.msra.mxu0 0
      %1779 = vmatprep.subr.bf16.mxu0 0
      %1780 = vmatpush1.bf16.msra.mxu0 0
      %1781 = vmatprep.subr.bf16.mxu0 0
      %1782 = vmatpush1.bf16.msra.mxu0 0
      %1783 = vmatprep.subr.bf16.mxu0 0
      %1784 = vmatpush1.bf16.msra.mxu0 0
      %1785 = vmatprep.subr.bf16.mxu0 0
      %1786 = vmatpush1.bf16.msra.mxu0 0
      %1787 = vmatprep.subr.bf16.mxu0 0
      %1788 = vmatpush1.bf16.msra.mxu0 0
      %1789 = vmatprep.subr.bf16.mxu0 0
      %1790 = vmatpush1.bf16.msra.mxu0 0
      %1791 = vmatprep.mubr.bf16.mxu0 0
      %1792 = vmatmul.mubr.bf16.gmra.mrb[0].mxu0 %v1672
      %v1793 = vpop.f32.mrb[0].mxu0
      %v1794 = vadd.f32 %v1709, %v1793
      %v1795 = vpop.f32.mrb[0].mxu0
      %v1796 = vpop.f32.mrb[0].mxu0
      %v1797 = vadd.f32 %v1709, %v1796
      %v1798 = vpop.f32.mrb[0].mxu0
      %1799 = vmatprep.mubr.bf16.mxu0 0
      %1800 = vmatmul.mubr.bf16.gmra.mrb[0].mxu0 %v1673
      %v1801 = vpop.f32.mrb[0].mxu0
      %v1802 = vadd.f32 %v1709, %v1801
      %v1803 = vpop.f32.mrb[0].mxu0
      %v1804 = vpop.f32.mrb[0].mxu0
      %v1805 = vadd.f32 %v1709, %v1804
      %v1806 = vpop.f32.mrb[0].mxu0
      %1807 = vmatprep.mubr.bf16.mxu0 0
      %1808 = vmatmul.mubr.bf16.gmra.mrb[0].mxu0 %v1674
      %v1809 = vpop.f32.mrb[0].mxu0
      %v1810 = vadd.f32 %v1709, %v1809
      %v1811 = vpop.f32.mrb[0].mxu0
      %v1812 = vpop.f32.mrb[0].mxu0
      %v1813 = vadd.f32 %v1709, %v1812
      %v1814 = vpop.f32.mrb[0].mxu0
      %1815 = vmatprep.mubr.bf16.mxu0 0
      %1816 = vmatmul.mubr.bf16.gmra.mrb[0].mxu0 %v1675
      %v1817 = vpop.f32.mrb[0].mxu0
      %v1818 = vadd.f32 %v1709, %v1817
      %v1819 = vpop.f32.mrb[0].mxu0
      %v1820 = vpop.f32.mrb[0].mxu0
      %v1821 = vadd.f32 %v1709, %v1820
      %v1822 = vpop.f32.mrb[0].mxu0
      %1823 = vmatprep.mubr.bf16.mxu0 0
      %1824 = vmatmul.mubr.bf16.gmra.mrb[0].mxu0 %v1676
      %v1825 = vpop.f32.mrb[0].mxu0
      %v1826 = vadd.f32 %v1709, %v1825
      %v1827 = vpop.f32.mrb[0].mxu0
      %v1828 = vpop.f32.mrb[0].mxu0
      %v1829 = vadd.f32 %v1709, %v1828
      %v1830 = vpop.f32.mrb[0].mxu0
      %1831 = vmatprep.mubr.bf16.mxu0 0
      %1832 = vmatmul.mubr.bf16.gmra.mrb[0].mxu0 %v1677
      %v1833 = vpop.f32.mrb[0].mxu0
      %v1834 = vadd.f32 %v1709, %v1833
      %v1835 = vpop.f32.mrb[0].mxu0
      %v1836 = vpop.f32.mrb[0].mxu0
      %v1837 = vadd.f32 %v1709, %v1836
      %v1838 = vpop.f32.mrb[0].mxu0
      %1839 = vmatprep.mubr.bf16.mxu0 0
      %1840 = vmatmul.mubr.bf16.gmra.mrb[0].mxu0 %v1678
      %v1841 = vpop.f32.mrb[0].mxu0
      %v1842 = vadd.f32 %v1709, %v1841
      %v1843 = vpop.f32.mrb[0].mxu0
      %v1844 = vpop.f32.mrb[0].mxu0
      %v1845 = vadd.f32 %v1709, %v1844
      %v1846 = vpop.f32.mrb[0].mxu0
      %1847 = vmatprep.mubr.bf16.mxu0 0
      %1848 = vmatmul.mubr.bf16.gmra.mrb[0].mxu0 %v1679
      %v1849 = vpop.f32.mrb[0].mxu0
      %v1850 = vadd.f32 %v1709, %v1849
      %v1851 = vpop.f32.mrb[0].mxu0
      %v1852 = vpop.f32.mrb[0].mxu0
      %v1853 = vadd.f32 %v1709, %v1852
      %v1854 = vpop.f32.mrb[0].mxu0
      %1855 = vmatprep.mubr.bf16.mxu0 0
      %1856 = vmatmul.mubr.bf16.gmra.mrb[0].mxu0 %v1680
      %v1857 = vpop.f32.mrb[0].mxu0
      %v1858 = vadd.f32 %v1709, %v1857
      %v1859 = vpop.f32.mrb[0].mxu0
      %v1860 = vpop.f32.mrb[0].mxu0
      %v1861 = vadd.f32 %v1709, %v1860
      %v1862 = vpop.f32.mrb[0].mxu0
      %1863 = vmatprep.mubr.bf16.mxu0 0
      %1864 = vmatmul.mubr.bf16.gmra.mrb[0].mxu0 %v1681
      %v1865 = vpop.f32.mrb[0].mxu0
      %v1866 = vadd.f32 %v1709, %v1865
      %v1867 = vpop.f32.mrb[0].mxu0
      %v1868 = vpop.f32.mrb[0].mxu0
      %v1869 = vadd.f32 %v1709, %v1868
      %v1870 = vpop.f32.mrb[0].mxu0
      %1871 = vmatprep.mubr.bf16.mxu0 0
      %1872 = vmatmul.mubr.bf16.gmra.mrb[0].mxu0 %v1682
      %v1873 = vpop.f32.mrb[0].mxu0
      %v1874 = vadd.f32 %v1709, %v1873
      %v1875 = vpop.f32.mrb[0].mxu0
      %v1876 = vpop.f32.mrb[0].mxu0
      %v1877 = vadd.f32 %v1709, %v1876
      %v1878 = vpop.f32.mrb[0].mxu0
      %1879 = vmatprep.mubr.bf16.mxu0 0
      %1880 = vmatmul.mubr.bf16.gmra.mrb[0].mxu0 %v1683
      %v1881 = vpop.f32.mrb[0].mxu0
      %v1882 = vadd.f32 %v1709, %v1881
      %v1883 = vpop.f32.mrb[0].mxu0
      %v1884 = vpop.f32.mrb[0].mxu0
      %v1885 = vadd.f32 %v1709, %v1884
      %v1886 = vpop.f32.mrb[0].mxu0
      %1887 = vmatprep.mubr.bf16.mxu0 0
      %1888 = vmatmul.mubr.bf16.gmra.mrb[0].mxu0 %v1684
      %v1889 = vpop.f32.mrb[0].mxu0
      %v1890 = vadd.f32 %v1709, %v1889
      %v1891 = vpop.f32.mrb[0].mxu0
      %v1892 = vpop.f32.mrb[0].mxu0
      %v1893 = vadd.f32 %v1709, %v1892
      %v1894 = vpop.f32.mrb[0].mxu0
      %1895 = vmatprep.mubr.bf16.mxu0 0
      %1896 = vmatmul.mubr.bf16.gmra.mrb[0].mxu0 %v1685
      %v1897 = vpop.f32.mrb[0].mxu0
      %v1898 = vadd.f32 %v1709, %v1897
      %v1899 = vpop.f32.mrb[0].mxu0
      %v1900 = vpop.f32.mrb[0].mxu0
      %v1901 = vadd.f32 %v1709, %v1900
      %v1902 = vpop.f32.mrb[0].mxu0
      %1903 = vmatprep.mubr.bf16.mxu0 0
      %1904 = vmatmul.mubr.bf16.gmra.mrb[0].mxu0 %v1686
      %v1905 = vpop.f32.mrb[0].mxu0
      %v1906 = vadd.f32 %v1709, %v1905
      %v1907 = vpop.f32.mrb[0].mxu0
      %v1908 = vpop.f32.mrb[0].mxu0
      %v1909 = vadd.f32 %v1709, %v1908
      %v1910 = vpop.f32.mrb[0].mxu0
      %1911 = vmatprep.mubr.bf16.mxu0 0
      %1912 = vmatmul.mubr.bf16.gmra.mrb[0].mxu0 %v1687
      %v1913 = vpop.f32.mrb[0].mxu0
      %v1914 = vadd.f32 %v1709, %v1913
      %v1915 = vpop.f32.mrb[0].mxu0
      %v1916 = vpop.f32.mrb[0].mxu0
      %v1917 = vadd.f32 %v1709, %v1916
      %v1918 = vpop.f32.mrb[0].mxu0
      %1919 = vdwg.mxu0
      %v1920 = vmax.f32 %v1794, 0.0
      %v1921 = vmax.f32 %v1797, 0.0
      %v1922 = vmax.f32 %v1802, 0.0
      %v1923 = vmax.f32 %v1805, 0.0
      %v1924 = vmax.f32 %v1810, 0.0
      %v1925 = vmax.f32 %v1813, 0.0
      %v1926 = vmax.f32 %v1818, 0.0
      %v1927 = vmax.f32 %v1821, 0.0
      %v1928 = vmax.f32 %v1826, 0.0
      %v1929 = vmax.f32 %v1829, 0.0
      %v1930 = vmax.f32 %v1834, 0.0
      %v1931 = vmax.f32 %v1837, 0.0
      %v1932 = vmax.f32 %v1842, 0.0
      %v1933 = vmax.f32 %v1845, 0.0
      %v1934 = vmax.f32 %v1850, 0.0
      %v1935 = vmax.f32 %v1853, 0.0
      %v1936 = vmax.f32 %v1858, 0.0
      %v1937 = vmax.f32 %v1861, 0.0
      %v1938 = vmax.f32 %v1866, 0.0
      %v1939 = vmax.f32 %v1869, 0.0
      %v1940 = vmax.f32 %v1874, 0.0
      %v1941 = vmax.f32 %v1877, 0.0
      %v1942 = vmax.f32 %v1882, 0.0
      %v1943 = vmax.f32 %v1885, 0.0
      %v1944 = vmax.f32 %v1890, 0.0
      %v1945 = vmax.f32 %v1893, 0.0
      %v1946 = vmax.f32 %v1898, 0.0
      %v1947 = vmax.f32 %v1901, 0.0
      %v1948 = vmax.f32 %v1906, 0.0
      %v1949 = vmax.f32 %v1909, 0.0
      %v1950 = vmax.f32 %v1914, 0.0
      %v1951 = vmax.f32 %v1917, 0.0
      %v1952 = vpack.c.bf16 %v1921, %v1920
      %v1953 = vpack.c.bf16 %v1923, %v1922
      %v1954 = vpack.c.bf16 %v1925, %v1924
      %v1955 = vpack.c.bf16 %v1927, %v1926
      %v1956 = vpack.c.bf16 %v1929, %v1928
      %v1957 = vpack.c.bf16 %v1931, %v1930
      %v1958 = vpack.c.bf16 %v1933, %v1932
      %v1959 = vpack.c.bf16 %v1935, %v1934
      %v1960 = vpack.c.bf16 %v1937, %v1936
      %v1961 = vpack.c.bf16 %v1939, %v1938
      %v1962 = vpack.c.bf16 %v1941, %v1940
      %v1963 = vpack.c.bf16 %v1943, %v1942
      %v1964 = vpack.c.bf16 %v1945, %v1944
      %v1965 = vpack.c.bf16 %v1947, %v1946
      %v1966 = vpack.c.bf16 %v1949, %v1948
      %v1967 = vpack.c.bf16 %v1951, %v1950
      %v1968 = vld [vmem:[%s11] sm:$0xf]
      %v1969 = vld [vmem:[%s11 + $0x4] sm:$0xf]
      %v1970 = vld [vmem:[%s11 + $0x8] sm:$0xf]
      %v1971 = vld [vmem:[%s11 + $0xc] sm:$0xf]
      %v1972 = vld [vmem:[%s11 + $0x10] sm:$0xf]
      %v1973 = vld [vmem:[%s11 + $0x14] sm:$0xf]
      %v1974 = vld [vmem:[%s11 + $0x18] sm:$0xf]
      %v1975 = vld [vmem:[%s11 + $0x1c] sm:$0xf]
      %v1976 = vld [vmem:[%s11 + $0x20] sm:$0xf]
      %v1977 = vld [vmem:[%s11 + $0x24] sm:$0xf]
      %v1978 = vld [vmem:[%s11 + $0x28] sm:$0xf]
      %v1979 = vld [vmem:[%s11 + $0x2c] sm:$0xf]
      %v1980 = vld [vmem:[%s11 + $0x30] sm:$0xf]
      %v1981 = vld [vmem:[%s11 + $0x34] sm:$0xf]
      %v1982 = vld [vmem:[%s11 + $0x38] sm:$0xf]
      %v1983 = vld [vmem:[%s11 + $0x3c] sm:$0xf]
      %v1984 = vld [vmem:[%s12] sm:$0x1]
      %v1986 = vlaneseq
      %v1987 = vshrl.u32 %v1986, 7
      %v1988 = vsub.s32 0, %v1987
      %v1989 = vrot.slane %v1984, %v1988
      %v2007 = vunpack.c.l.b16 %v1968
      %v2008 = vunpack.c.l.b16 %v1969
      %v2009 = vunpack.c.l.b16 %v1970
      %v2010 = vunpack.c.l.b16 %v1971
      %v2011 = vunpack.c.l.b16 %v1972
      %v2012 = vunpack.c.l.b16 %v1973
      %v2013 = vunpack.c.l.b16 %v1974
      %v2014 = vunpack.c.l.b16 %v1975
      %v2015 = vunpack.c.l.b16 %v1976
      %v2016 = vunpack.c.l.b16 %v1977
      %v2017 = vunpack.c.l.b16 %v1978
      %v2018 = vunpack.c.l.b16 %v1979
      %v2019 = vunpack.c.l.b16 %v1980
      %v2020 = vunpack.c.l.b16 %v1981
      %v2021 = vunpack.c.l.b16 %v1982
      %v2022 = vunpack.c.l.b16 %v1983
      %v2023 = vpack.c.b16 %v2008, %v2007
      %v2024 = vpack.c.b16 %v2010, %v2009
      %v2025 = vpack.c.b16 %v2012, %v2011
      %v2026 = vpack.c.b16 %v2014, %v2013
      %v2027 = vpack.c.b16 %v2016, %v2015
      %v2028 = vpack.c.b16 %v2018, %v2017
      %v2029 = vpack.c.b16 %v2020, %v2019
      %v2030 = vpack.c.b16 %v2022, %v2021
      %2039 = vmatprep.subr.bf16.mxu0 0
      %2040 = vmatpush1.bf16.msra.mxu0 %v2023
      %2041 = vmatprep.subr.bf16.mxu0 0
      %2042 = vmatpush1.bf16.msra.mxu0 %v2024
      %2043 = vmatprep.subr.bf16.mxu0 0
      %2044 = vmatpush1.bf16.msra.mxu0 %v2025
      %2045 = vmatprep.subr.bf16.mxu0 0
      %2046 = vmatpush1.bf16.msra.mxu0 %v2026
      %2047 = vmatprep.subr.bf16.mxu0 0
      %2048 = vmatpush1.bf16.msra.mxu0 %v2027
      %2049 = vmatprep.subr.bf16.mxu0 0
      %2050 = vmatpush1.bf16.msra.mxu0 %v2028
      %2051 = vmatprep.subr.bf16.mxu0 0
      %2052 = vmatpush1.bf16.msra.mxu0 %v2029
      %2053 = vmatprep.subr.bf16.mxu0 0
      %2054 = vmatpush1.bf16.msra.mxu0 %v2030
      %2055 = vmatprep.subr.bf16.mxu0 0
      %2056 = vmatpush1.bf16.msra.mxu0 0
      %2057 = vmatprep.subr.bf16.mxu0 0
      %2058 = vmatpush1.bf16.msra.mxu0 0
      %2059 = vmatprep.subr.bf16.mxu0 0
      %2060 = vmatpush1.bf16.msra.mxu0 0
      %2061 = vmatprep.subr.bf16.mxu0 0
      %2062 = vmatpush1.bf16.msra.mxu0 0
      %2063 = vmatprep.subr.bf16.mxu0 0
      %2064 = vmatpush1.bf16.msra.mxu0 0
      %2065 = vmatprep.subr.bf16.mxu0 0
      %2066 = vmatpush1.bf16.msra.mxu0 0
      %2067 = vmatprep.subr.bf16.mxu0 0
      %2068 = vmatpush1.bf16.msra.mxu0 0
      %2069 = vmatprep.subr.bf16.mxu0 0
      %2070 = vmatpush1.bf16.msra.mxu0 0
      %2071 = vmatprep.mubr.bf16.mxu0 0
      %2072 = vmatmul.mubr.bf16.gmra.mrb[0].mxu0 %v1952
      %v2073 = vpop.f32.mrb[0].mxu0
      %v2074 = vadd.f32 %v1989, %v2073
      %v2075 = vpop.f32.mrb[0].mxu0
      %v2076 = vpop.f32.mrb[0].mxu0
      %v2077 = vadd.f32 %v1989, %v2076
      %v2078 = vpop.f32.mrb[0].mxu0
      %2079 = vmatprep.mubr.bf16.mxu0 0
      %2080 = vmatmul.mubr.bf16.gmra.mrb[0].mxu0 %v1953
      %v2081 = vpop.f32.mrb[0].mxu0
      %v2082 = vadd.f32 %v1989, %v2081
      %v2083 = vpop.f32.mrb[0].mxu0
      %v2084 = vpop.f32.mrb[0].mxu0
      %v2085 = vadd.f32 %v1989, %v2084
      %v2086 = vpop.f32.mrb[0].mxu0
      %2087 = vmatprep.mubr.bf16.mxu0 0
      %2088 = vmatmul.mubr.bf16.gmra.mrb[0].mxu0 %v1954
      %v2089 = vpop.f32.mrb[0].mxu0
      %v2090 = vadd.f32 %v1989, %v2089
      %v2091 = vpop.f32.mrb[0].mxu0
      %v2092 = vpop.f32.mrb[0].mxu0
      %v2093 = vadd.f32 %v1989, %v2092
      %v2094 = vpop.f32.mrb[0].mxu0
      %2095 = vmatprep.mubr.bf16.mxu0 0
      %2096 = vmatmul.mubr.bf16.gmra.mrb[0].mxu0 %v1955
      %v2097 = vpop.f32.mrb[0].mxu0
      %v2098 = vadd.f32 %v1989, %v2097
      %v2099 = vpop.f32.mrb[0].mxu0
      %v2100 = vpop.f32.mrb[0].mxu0
      %v2101 = vadd.f32 %v1989, %v2100
      %v2102 = vpop.f32.mrb[0].mxu0
      %2103 = vmatprep.mubr.bf16.mxu0 0
      %2104 = vmatmul.mubr.bf16.gmra.mrb[0].mxu0 %v1956
      %v2105 = vpop.f32.mrb[0].mxu0
      %v2106 = vadd.f32 %v1989, %v2105
      %v2107 = vpop.f32.mrb[0].mxu0
      %v2108 = vpop.f32.mrb[0].mxu0
      %v2109 = vadd.f32 %v1989, %v2108
      %v2110 = vpop.f32.mrb[0].mxu0
      %2111 = vmatprep.mubr.bf16.mxu0 0
      %2112 = vmatmul.mubr.bf16.gmra.mrb[0].mxu0 %v1957
      %v2113 = vpop.f32.mrb[0].mxu0
      %v2114 = vadd.f32 %v1989, %v2113
      %v2115 = vpop.f32.mrb[0].mxu0
      %v2116 = vpop.f32.mrb[0].mxu0
      %v2117 = vadd.f32 %v1989, %v2116
      %v2118 = vpop.f32.mrb[0].mxu0
      %2119 = vmatprep.mubr.bf16.mxu0 0
      %2120 = vmatmul.mubr.bf16.gmra.mrb[0].mxu0 %v1958
      %v2121 = vpop.f32.mrb[0].mxu0
      %v2122 = vadd.f32 %v1989, %v2121
      %v2123 = vpop.f32.mrb[0].mxu0
      %v2124 = vpop.f32.mrb[0].mxu0
      %v2125 = vadd.f32 %v1989, %v2124
      %v2126 = vpop.f32.mrb[0].mxu0
      %2127 = vmatprep.mubr.bf16.mxu0 0
      %2128 = vmatmul.mubr.bf16.gmra.mrb[0].mxu0 %v1959
      %v2129 = vpop.f32.mrb[0].mxu0
      %v2130 = vadd.f32 %v1989, %v2129
      %v2131 = vpop.f32.mrb[0].mxu0
      %v2132 = vpop.f32.mrb[0].mxu0
      %v2133 = vadd.f32 %v1989, %v2132
      %v2134 = vpop.f32.mrb[0].mxu0
      %2135 = vmatprep.mubr.bf16.mxu0 0
      %2136 = vmatmul.mubr.bf16.gmra.mrb[0].mxu0 %v1960
      %v2137 = vpop.f32.mrb[0].mxu0
      %v2138 = vadd.f32 %v1989, %v2137
      %v2139 = vpop.f32.mrb[0].mxu0
      %v2140 = vpop.f32.mrb[0].mxu0
      %v2141 = vadd.f32 %v1989, %v2140
      %v2142 = vpop.f32.mrb[0].mxu0
      %2143 = vmatprep.mubr.bf16.mxu0 0
      %2144 = vmatmul.mubr.bf16.gmra.mrb[0].mxu0 %v1961
      %v2145 = vpop.f32.mrb[0].mxu0
      %v2146 = vadd.f32 %v1989, %v2145
      %v2147 = vpop.f32.mrb[0].mxu0
      %v2148 = vpop.f32.mrb[0].mxu0
      %v2149 = vadd.f32 %v1989, %v2148
      %v2150 = vpop.f32.mrb[0].mxu0
      %2151 = vmatprep.mubr.bf16.mxu0 0
      %2152 = vmatmul.mubr.bf16.gmra.mrb[0].mxu0 %v1962
      %v2153 = vpop.f32.mrb[0].mxu0
      %v2154 = vadd.f32 %v1989, %v2153
      %v2155 = vpop.f32.mrb[0].mxu0
      %v2156 = vpop.f32.mrb[0].mxu0
      %v2157 = vadd.f32 %v1989, %v2156
      %v2158 = vpop.f32.mrb[0].mxu0
      %2159 = vmatprep.mubr.bf16.mxu0 0
      %2160 = vmatmul.mubr.bf16.gmra.mrb[0].mxu0 %v1963
      %v2161 = vpop.f32.mrb[0].mxu0
      %v2162 = vadd.f32 %v1989, %v2161
      %v2163 = vpop.f32.mrb[0].mxu0
      %v2164 = vpop.f32.mrb[0].mxu0
      %v2165 = vadd.f32 %v1989, %v2164
      %v2166 = vpop.f32.mrb[0].mxu0
      %2167 = vmatprep.mubr.bf16.mxu0 0
      %2168 = vmatmul.mubr.bf16.gmra.mrb[0].mxu0 %v1964
      %v2169 = vpop.f32.mrb[0].mxu0
      %v2170 = vadd.f32 %v1989, %v2169
      %v2171 = vpop.f32.mrb[0].mxu0
      %v2172 = vpop.f32.mrb[0].mxu0
      %v2173 = vadd.f32 %v1989, %v2172
      %v2174 = vpop.f32.mrb[0].mxu0
      %2175 = vmatprep.mubr.bf16.mxu0 0
      %2176 = vmatmul.mubr.bf16.gmra.mrb[0].mxu0 %v1965
      %v2177 = vpop.f32.mrb[0].mxu0
      %v2178 = vadd.f32 %v1989, %v2177
      %v2179 = vpop.f32.mrb[0].mxu0
      %v2180 = vpop.f32.mrb[0].mxu0
      %v2181 = vadd.f32 %v1989, %v2180
      %v2182 = vpop.f32.mrb[0].mxu0
      %2183 = vmatprep.mubr.bf16.mxu0 0
      %2184 = vmatmul.mubr.bf16.gmra.mrb[0].mxu0 %v1966
      %v2185 = vpop.f32.mrb[0].mxu0
      %v2186 = vadd.f32 %v1989, %v2185
      %v2187 = vpop.f32.mrb[0].mxu0
      %v2188 = vpop.f32.mrb[0].mxu0
      %v2189 = vadd.f32 %v1989, %v2188
      %v2190 = vpop.f32.mrb[0].mxu0
      %2191 = vmatprep.mubr.bf16.mxu0 0
      %2192 = vmatmul.mubr.bf16.gmra.mrb[0].mxu0 %v1967
      %v2193 = vpop.f32.mrb[0].mxu0
      %v2194 = vadd.f32 %v1989, %v2193
      %v2195 = vpop.f32.mrb[0].mxu0
      %v2196 = vpop.f32.mrb[0].mxu0
      %v2197 = vadd.f32 %v1989, %v2196
      %v2198 = vpop.f32.mrb[0].mxu0
      %2199 = vdwg.mxu0
      %2200 = vst.msk [vmem:[%s477] sm:$0xff] %vm557, %v2074
      %2201 = vst.msk [vmem:[%s477 + $0x8] sm:$0xff] %vm557, %v2077
      %2202 = vst.msk [vmem:[%s477 + $0x10] sm:$0xff] %vm557, %v2082
      %2203 = vst.msk [vmem:[%s477 + $0x18] sm:$0xff] %vm557, %v2085
      %2204 = vst.msk [vmem:[%s477 + $0x20] sm:$0xff] %vm557, %v2090
      %2205 = vst.msk [vmem:[%s477 + $0x28] sm:$0xff] %vm557, %v2093
      %2206 = vst.msk [vmem:[%s477 + $0x30] sm:$0xff] %vm557, %v2098
      %2207 = vst.msk [vmem:[%s477 + $0x38] sm:$0xff] %vm557, %v2101
      %2208 = vst.msk [vmem:[%s477 + $0x40] sm:$0xff] %vm557, %v2106
      %2209 = vst.msk [vmem:[%s477 + $0x48] sm:$0xff] %vm557, %v2109
      %2210 = vst.msk [vmem:[%s477 + $0x50] sm:$0xff] %vm557, %v2114
      %2211 = vst.msk [vmem:[%s477 + $0x58] sm:$0xff] %vm557, %v2117
      %2212 = vst.msk [vmem:[%s477 + $0x60] sm:$0xff] %vm557, %v2122
      %2213 = vst.msk [vmem:[%s477 + $0x68] sm:$0xff] %vm557, %v2125
      %2214 = vst.msk [vmem:[%s477 + $0x70] sm:$0xff] %vm557, %v2130
      %2215 = vst.msk [vmem:[%s477 + $0x78] sm:$0xff] %vm557, %v2133
      %2216 = vst.msk [vmem:[%s477 + $0x80] sm:$0xff] %vm557, %v2138
      %2217 = vst.msk [vmem:[%s477 + $0x88] sm:$0xff] %vm557, %v2141
      %2218 = vst.msk [vmem:[%s477 + $0x90] sm:$0xff] %vm557, %v2146
      %2219 = vst.msk [vmem:[%s477 + $0x98] sm:$0xff] %vm557, %v2149
      %2220 = vst.msk [vmem:[%s477 + $0xa0] sm:$0xff] %vm557, %v2154
      %2221 = vst.msk [vmem:[%s477 + $0xa8] sm:$0xff] %vm557, %v2157
      %2222 = vst.msk [vmem:[%s477 + $0xb0] sm:$0xff] %vm557, %v2162
      %2223 = vst.msk [vmem:[%s477 + $0xb8] sm:$0xff] %vm557, %v2165
      %2224 = vst.msk [vmem:[%s477 + $0xc0] sm:$0xff] %vm557, %v2170
      %2225 = vst.msk [vmem:[%s477 + $0xc8] sm:$0xff] %vm557, %v2173
      %2226 = vst.msk [vmem:[%s477 + $0xd0] sm:$0xff] %vm557, %v2178
      %2227 = vst.msk [vmem:[%s477 + $0xd8] sm:$0xff] %vm557, %v2181
      %2228 = vst.msk [vmem:[%s477 + $0xe0] sm:$0xff] %vm557, %v2186
      %2229 = vst.msk [vmem:[%s477 + $0xe8] sm:$0xff] %vm557, %v2189
      %2230 = vst.msk [vmem:[%s477 + $0xf0] sm:$0xff] %vm557, %v2194
      %2231 = vst.msk [vmem:[%s477 + $0xf8] sm:$0xff] %vm557, %v2197
      %s2232 = smul.u32 32, %s26
      %p2233 = scmp.lt.s32.totalorder %s2232, 63
      %s2234 = scalar_select %p2233, %s2232, 63
      %s2235 = smul.addr %s2234, 8
      %s2236 = scalar_lea.vmem %s13, %s2235
      %s2237 = smul.u32 32, %s26
      %p2238 = scmp.lt.s32.totalorder %s2237, 63
      %s2239 = scalar_select %p2238, %s2237, 63
      %s2240 = smul.addr %s2239, 8
      %s2241 = scalar_lea.vmem %s14, %s2240
      // Predicated region
      $region73: #{autoencoder_forward.1} parent=71 // pred_check
        %p2242 = pneg %p322
      $region74: #{autoencoder_forward.1} parent=71 // pred_check_branch
        %2244 = sbr.rel (%p2242) target = $region76
      $region75: #{autoencoder_forward.1} parent=71 // pred_region
        %s2245 = smul.u32 32, %s26
      $region76: #{autoencoder_forward.1} parent=71 // pred_fallthru
        _
      // Predicated region
      $region77: #{autoencoder_forward.1} parent=71 // pred_check
        %p2246 = pneg %p348
      $region78: #{autoencoder_forward.1} parent=71 // pred_check_branch
        %2248 = sbr.rel (%p2246) target = $region80
      $region79: #{autoencoder_forward.1} parent=71 // pred_region
        %s2249 = smul.u32 32, %s26
      $region80: #{autoencoder_forward.1} parent=71 // pred_fallthru
        _
    $region72: #{autoencoder_forward.1} parent=5 // pred_fallthru
      _
    %p2250 = scmp.le.s32.totalorder 2, %s21
    // Predicated region
    $region81: #{autoencoder_forward.1} parent=5 // pred_check
      %p2251 = pneg %p2250
    $region82: #{autoencoder_forward.1} parent=5 // pred_check_branch
      %2253 = sbr.rel (%p2251) target = $region84
    $region83: #{autoencoder_forward.1} parent=5 // pred_region
      %s2254 = ssub.s32 %s21, 2
      // Predicated region
      $region85: #{autoencoder_forward.1} parent=83 // pred_check
        %p2255 = pneg %p328
      $region86: #{autoencoder_forward.1} parent=83 // pred_check_branch
        %2257 = sbr.rel (%p2255) target = $region88
      $region87: #{autoencoder_forward.1} parent=83 // pred_region
        %s2258 = smul.u32 32, %s27
        %p2259 = scmp.lt.s32.totalorder %s2258, 63
        %s2260 = scalar_select %p2259, %s2258, 63
        %s2261 = smul.addr %s2260, 8
        %s2262 = scalar_lea.vmem %s13, %s2261
      $region88: #{autoencoder_forward.1} parent=83 // pred_fallthru
        _
      // Predicated region
      $region89: #{autoencoder_forward.1} parent=83 // pred_check
        %p2263 = pneg %p354
      $region90: #{autoencoder_forward.1} parent=83 // pred_check_branch
        %2265 = sbr.rel (%p2263) target = $region92
      $region91: #{autoencoder_forward.1} parent=83 // pred_region
        %s2266 = smul.u32 32, %s27
        %p2267 = scmp.lt.s32.totalorder %s2266, 63
        %s2268 = scalar_select %p2267, %s2266, 63
        %s2269 = smul.addr %s2268, 8
        %s2270 = scalar_lea.vmem %s14, %s2269
      $region92: #{autoencoder_forward.1} parent=83 // pred_fallthru
        _
    $region84: #{autoencoder_forward.1} parent=5 // pred_fallthru
      _
  $region6: #{autoencoder_forward.1} parent=0 // loop_footer
    %s25 = sadd.s32 1, %s21
  $region7: #{autoencoder_forward.1} parent=0 // loop_footer_branch
    %20 = sbr.rel target = $region3
  $region8: #{autoencoder_forward.1} parent=0 // loop_exit
    _

</llo_original>
